<compile_context>
chip_gen: v7x
topology: tpu7x:2x2x1
jax: 0.10.0
libtpu: 0.0.40
codegen_flags: <defaults>
</compile_context>

<pallas_src>
import jax
import jax.numpy as jnp
from jax import lax
from jax.experimental import pallas as pl
from jax.experimental.pallas import tpu as pltpu

# ---- module hyper-parameters (small, deterministic, synthetic) --------------
N_HEADS = 4
D_MODEL = 32
D_FF = 64
SEQ = 8
BATCH = 2
EPS = 1e-5  # nn.LayerNorm default eps


# ---- small in-kernel helpers -------------------------------------------------
def _layer_norm(x, gamma, beta):
    mean = jnp.mean(x, axis=-1, keepdims=True)
    var = jnp.mean((x - mean) ** 2, axis=-1, keepdims=True)
    return (x - mean) * lax.rsqrt(var + EPS) * gamma + beta


# ---- fused encoder-layer kernel ----------------------------------------------
def make_encoder_kernel(nb, T, D, H, d_ff):
    """nb = batch elements handled per grid step."""
    dk = D // H

    def kernel(x_ref, wqkv_ref, wo_ref, w1_ref, w2_ref, vec_ref,
               out_ref, attn_ref, ctx_ref):
        # packed small vectors (row layout of the (8,128) vec input)
        bqkv = vec_ref[0:1, :3 * D]      # bq*scale | bk | bv
        bo   = vec_ref[1:2, :D]
        b1   = vec_ref[2:3, :d_ff]
        b2   = vec_ref[3:4, :D]
        g1   = vec_ref[4:5, :D]
        be1  = vec_ref[5:6, :D]
        g2   = vec_ref[6:7, :D]
        be2  = vec_ref[7:8, :D]

        x = x_ref[...]                                            # (nb*T, D)

        # fused QKV projection (scale already folded into the Wq / bq block)
        qkv = jnp.dot(x, wqkv_ref[...],
                      preferred_element_type=jnp.float32) + bqkv  # (nb*T, 3D)
        q = qkv[:, :D]
        k = qkv[:, D:2 * D]
        v = qkv[:, 2 * D:3 * D]

        # --- multi-headed self-attention (mask=None), slf_attn_dropout -> identity
        for b in range(nb):                      # static, tiny
            r0 = b * T
            qb = q[r0:r0 + T]
            kb = k[r0:r0 + T]
            vb = v[r0:r0 + T]
            for h in range(H):                   # static, tiny
                c0 = h * dk
                # q_h @ k_h^T via dot_general (no explicit transpose)
                s = lax.dot_general(qb[:, c0:c0 + dk], kb[:, c0:c0 + dk],
                                    (((1,), (1,)), ((), ())),
                                    preferred_element_type=jnp.float32)   # (T, T)
                m = jnp.max(s, axis=-1, keepdims=True)
                e = jnp.exp(s - m)
                p = e * pl.reciprocal(jnp.sum(e, axis=-1, keepdims=True),
                                      approx=True)
                # lane-denser attention slab: (nb*T, H*T)
                attn_ref[r0:r0 + T, h * T:(h + 1) * T] = p
                # context tile written straight into VMEM scratch (no concat)
                ctx_ref[r0:r0 + T, c0:c0 + dk] = jnp.dot(
                    p, vb[:, c0:c0 + dk], preferred_element_type=jnp.float32)

        ctx = ctx_ref[...]                                        # (nb*T, D)
        attn_out = jnp.dot(ctx, wo_ref[...],
                           preferred_element_type=jnp.float32) + bo

        # residual + dropout1 (identity in eval) then post-norm (pre_norm=False)
        x1 = _layer_norm(x + attn_out, g1, be1)

        # --- position-wise feed forward: Linear -> ReLU -> (dropout) -> Linear
        hdn = jnp.maximum(
            jnp.dot(x1, w1_ref[...], preferred_element_type=jnp.float32) + b1, 0.0)
        ff = jnp.dot(hdn, w2_ref[...], preferred_element_type=jnp.float32) + b2

        # residual + dropout2 (identity in eval) then post-norm
        out_ref[...] = _layer_norm(x1 + ff, g2, be2)
        # TODO(synk): training-mode dropout would need pltpu.prng_* inside the kernel.

    return kernel


# ---- parameter fusion / packing (wrapper-side plumbing) -----------------------
def prepare_params(params):
    dk = D_MODEL // N_HEADS
    scale = 1.0 / (dk ** 0.5)
    # fold 1/sqrt(d_k) into the Q block (weights + bias) once
    wqkv = jnp.concatenate(
        [params["wq"] * scale, params["wk"], params["wv"]], axis=1)      # (D, 3D)
    bqkv = jnp.concatenate(
        [params["bq"][0] * scale, params["bk"][0], params["bv"][0]])     # (3D,)

    vec = jnp.zeros((8, 128), jnp.float32)
    vec = vec.at[0, :3 * D_MODEL].set(bqkv)
    vec = vec.at[1, :D_MODEL].set(params["bo"][0])
    vec = vec.at[2, :D_FF].set(params["b1"][0])
    vec = vec.at[3, :D_MODEL].set(params["b2"][0])
    vec = vec.at[4, :D_MODEL].set(params["g1"][0])
    vec = vec.at[5, :D_MODEL].set(params["be1"][0])
    vec = vec.at[6, :D_MODEL].set(params["g2"][0])
    vec = vec.at[7, :D_MODEL].set(params["be2"][0])
    return wqkv, params["wo"], params["w1"], params["w2"], vec


def _default_batch_blocks(B):
    # v7x has 2 TensorCores per chip -> keep a 2-wide "parallel" grid there;
    # on single-TC chips (v5e/v6e) a single grid step minimises per-step overhead.
    try:
        kind = jax.devices()[0].device_kind.lower()
    except Exception:
        return 1
    if ("v7" in kind or "7x" in kind) and B % 2 == 0:
        return 2
    return 1


# ---- wrapper ------------------------------------------------------------------
def encoder_layer(x, params, *, batch_blocks=None):
    B, T, D = x.shape
    H = N_HEADS
    if batch_blocks is None:
        batch_blocks = _default_batch_blocks(B)
    assert B % batch_blocks == 0
    nb = B // batch_blocks          # batch elements per grid step
    rows = nb * T                   # activation rows per grid step

    wqkv, wo, w1, w2, vec = prepare_params(params)
    x_flat = x.reshape(B * T, D)

    kernel = make_encoder_kernel(nb, T, D, H, D_FF)

    out_flat, attn_flat = pl.pallas_call(
        kernel,
        grid=(batch_blocks,),
        in_specs=[
            pl.BlockSpec((rows, D), lambda i: (i, 0)),         # x slab
            pl.BlockSpec(wqkv.shape, lambda i: (0, 0)),        # fused Wqkv
            pl.BlockSpec(wo.shape, lambda i: (0, 0)),
            pl.BlockSpec(w1.shape, lambda i: (0, 0)),
            pl.BlockSpec(w2.shape, lambda i: (0, 0)),
            pl.BlockSpec(vec.shape, lambda i: (0, 0)),         # packed vectors
        ],
        out_specs=[
            pl.BlockSpec((rows, D), lambda i: (i, 0)),
            pl.BlockSpec((rows, H * T), lambda i: (i, 0)),
        ],
        out_shape=[
            jax.ShapeDtypeStruct((B * T, D), jnp.float32),
            jax.ShapeDtypeStruct((B * T, H * T), jnp.float32),
        ],
        scratch_shapes=[pltpu.VMEM((rows, D), jnp.float32)],   # ctx scratch
        compiler_params=pltpu.CompilerParams(
            dimension_semantics=("parallel",)),
    )(x_flat, wqkv, wo, w1, w2, vec)

    out = out_flat.reshape(B, T, D)
    # attn_flat[b*T + tq, h*T + tk] -> (B, H, T, T); pure wrapper-side plumbing.
    attn = attn_flat.reshape(B, T, H, T).transpose(0, 2, 1, 3)
    return out, attn


# ---- deterministic parameter init (synthetic; shapes match nn.Module) ---------
def init_params(key):
    ks = jax.random.split(key, 8)
    s = 0.05
    p = {
        "wq": s * jax.random.normal(ks[0], (D_MODEL, D_MODEL), jnp.float32),
        "wk": s * jax.random.normal(ks[1], (D_MODEL, D_MODEL), jnp.float32),
        "wv": s * jax.random.normal(ks[2], (D_MODEL, D_MODEL), jnp.float32),
        "wo": s * jax.random.normal(ks[3], (D_MODEL, D_MODEL), jnp.float32),
        "w1": s * jax.random.normal(ks[4], (D_MODEL, D_FF), jnp.float32),
        "w2": s * jax.random.normal(ks[5], (D_FF, D_MODEL), jnp.float32),
        "bq": 0.01 * jnp.ones((1, D_MODEL), jnp.float32),
        "bk": -0.01 * jnp.ones((1, D_MODEL), jnp.float32),
        "bv": 0.02 * jnp.ones((1, D_MODEL), jnp.float32),
        "bo": 0.0 * jnp.ones((1, D_MODEL), jnp.float32),
        "b1": 0.01 * jnp.ones((1, D_FF), jnp.float32),
        "b2": 0.0 * jnp.ones((1, D_MODEL), jnp.float32),
        "g1": jnp.ones((1, D_MODEL), jnp.float32),
        "be1": jnp.zeros((1, D_MODEL), jnp.float32),
        "g2": jnp.ones((1, D_MODEL), jnp.float32),
        "be2": jnp.zeros((1, D_MODEL), jnp.float32),
    }
    return p


# ---- plain-JAX reference (same math, for a correctness sanity check) ----------
def ref_encoder_layer(x, p):
    def ln(t, g, b):
        m = t.mean(-1, keepdims=True)
        v = ((t - m) ** 2).mean(-1, keepdims=True)
        return (t - m) / jnp.sqrt(v + EPS) * g + b

    B, T, D = x.shape
    H, dk = N_HEADS, D_MODEL // N_HEADS
    q = (x @ p["wq"] + p["bq"]).reshape(B, T, H, dk).transpose(0, 2, 1, 3)
    k = (x @ p["wk"] + p["bk"]).reshape(B, T, H, dk).transpose(0, 2, 1, 3)
    v = (x @ p["wv"] + p["bv"]).reshape(B, T, H, dk).transpose(0, 2, 1, 3)
    s = jnp.einsum("bhqd,bhkd->bhqk", q, k) / jnp.sqrt(dk)
    attn = jax.nn.softmax(s, axis=-1)
    ctx = jnp.einsum("bhqk,bhkd->bhqd", attn, v).transpose(0, 2, 1, 3).reshape(B, T, D)
    x1 = ln(x + (ctx @ p["wo"] + p["bo"]), p["g1"], p["be1"])
    ff = jnp.maximum(x1 @ p["w1"] + p["b1"], 0.0) @ p["w2"] + p["b2"]
    out = ln(x1 + ff, p["g2"], p["be2"])
    return out, attn


if __name__ == "__main__":
    key = jax.random.PRNGKey(0)
    kx, kp = jax.random.split(key)
    x = jax.random.normal(kx, (BATCH, SEQ, D_MODEL), jnp.float32)
    params = init_params(kp)

    out, attn = encoder_layer(x, params)
    out = jax.block_until_ready(out)
    attn = jax.block_until_ready(attn)

    ref_out, ref_attn = ref_encoder_layer(x, params)
    assert out.shape == (BATCH, SEQ, D_MODEL)
    assert attn.shape == (BATCH, N_HEADS, SEQ, SEQ)
    # slightly looser tolerance: softmax denom uses the EUP approx reciprocal
    assert jnp.allclose(out, ref_out, rtol=5e-3, atol=5e-3)
    assert jnp.allclose(attn, ref_attn, rtol=5e-3, atol=5e-3)

    print("KERNEL_OK")
</pallas_src>

<mosaic_0001>
module attributes {stable_mosaic.version = 11 : i64} {
  func.func @kernel(%arg0: i32, %arg1: memref<16x32xf32, #tpu.memory_space<vmem>>, %arg2: memref<32x96xf32, #tpu.memory_space<vmem>>, %arg3: memref<32x32xf32, #tpu.memory_space<vmem>>, %arg4: memref<32x64xf32, #tpu.memory_space<vmem>>, %arg5: memref<64x32xf32, #tpu.memory_space<vmem>>, %arg6: memref<8x128xf32, #tpu.memory_space<vmem>>, %arg7: memref<16x32xf32, #tpu.memory_space<vmem>>, %arg8: memref<16x32xf32, #tpu.memory_space<vmem>>, %arg9: memref<16x32xf32, #tpu.memory_space<vmem>>) attributes {dimension_semantics = [#tpu.dimension_semantics<parallel>], iteration_bounds = array<i64: 1>, scalar_prefetch = 0 : i64, scratch_operands = 1 : i64, tpu.core_type = #tpu.core_type<tc>, window_params = [{transform_indices = @transform_0, window_bounds = array<i64: 16, 32>}, {pipeline_mode = #tpu.pipeline_mode<synchronous>, transform_indices = @transform_1, window_bounds = array<i64: 32, 96>}, {pipeline_mode = #tpu.pipeline_mode<synchronous>, transform_indices = @transform_2, window_bounds = array<i64: 32, 32>}, {pipeline_mode = #tpu.pipeline_mode<synchronous>, transform_indices = @transform_3, window_bounds = array<i64: 32, 64>}, {pipeline_mode = #tpu.pipeline_mode<synchronous>, transform_indices = @transform_4, window_bounds = array<i64: 64, 32>}, {pipeline_mode = #tpu.pipeline_mode<synchronous>, transform_indices = @transform_5, window_bounds = array<i64: 8, 128>}, {transform_indices = @transform_6, window_bounds = array<i64: 16, 32>}, {transform_indices = @transform_7, window_bounds = array<i64: 16, 32>}]} {
    %c0 = arith.constant 0 : index
    %c0_0 = arith.constant 0 : index
    %0 = vector.load %arg6[%c0, %c0_0] : memref<8x128xf32, #tpu.memory_space<vmem>>, vector<1x96xf32>
    %c1 = arith.constant 1 : index
    %c0_1 = arith.constant 0 : index
    %1 = vector.load %arg6[%c1, %c0_1] : memref<8x128xf32, #tpu.memory_space<vmem>>, vector<1x32xf32>
    %c2 = arith.constant 2 : index
    %c0_2 = arith.constant 0 : index
    %2 = vector.load %arg6[%c2, %c0_2] : memref<8x128xf32, #tpu.memory_space<vmem>>, vector<1x64xf32>
    %c3 = arith.constant 3 : index
    %c0_3 = arith.constant 0 : index
    %3 = vector.load %arg6[%c3, %c0_3] : memref<8x128xf32, #tpu.memory_space<vmem>>, vector<1x32xf32>
    %c4 = arith.constant 4 : index
    %c0_4 = arith.constant 0 : index
    %4 = vector.load %arg6[%c4, %c0_4] : memref<8x128xf32, #tpu.memory_space<vmem>>, vector<1x32xf32>
    %c5 = arith.constant 5 : index
    %c0_5 = arith.constant 0 : index
    %5 = vector.load %arg6[%c5, %c0_5] : memref<8x128xf32, #tpu.memory_space<vmem>>, vector<1x32xf32>
    %c6 = arith.constant 6 : index
    %c0_6 = arith.constant 0 : index
    %6 = vector.load %arg6[%c6, %c0_6] : memref<8x128xf32, #tpu.memory_space<vmem>>, vector<1x32xf32>
    %c7 = arith.constant 7 : index
    %c0_7 = arith.constant 0 : index
    %7 = vector.load %arg6[%c7, %c0_7] : memref<8x128xf32, #tpu.memory_space<vmem>>, vector<1x32xf32>
    %c0_8 = arith.constant 0 : index
    %c0_9 = arith.constant 0 : index
    %8 = vector.load %arg1[%c0_8, %c0_9] : memref<16x32xf32, #tpu.memory_space<vmem>>, vector<16x32xf32>
    %c0_10 = arith.constant 0 : index
    %c0_11 = arith.constant 0 : index
    %9 = vector.load %arg2[%c0_10, %c0_11] : memref<32x96xf32, #tpu.memory_space<vmem>>, vector<32x96xf32>
    %cst = arith.constant dense<0.000000e+00> : vector<16x96xf32>
    %10 = tpu.matmul %8, %9, %cst {dimension_numbers = #tpu.dot_dimension_numbers<[1], [0], [0], [1], [0, 0, 1, 1], [], []>} : vector<16x32xf32>, vector<32x96xf32>, vector<16x96xf32> -> vector<16x96xf32>
    %11 = vector.broadcast %0 : vector<1x96xf32> to vector<16x96xf32>
    %12 = arith.addf %10, %11 : vector<16x96xf32>
    %13 = vector.extract_strided_slice %12 {offsets = [0, 0], sizes = [16, 32], strides = [1, 1]} : vector<16x96xf32> to vector<16x32xf32>
    %14 = vector.extract_strided_slice %12 {offsets = [0, 32], sizes = [16, 32], strides = [1, 1]} : vector<16x96xf32> to vector<16x32xf32>
    %15 = vector.extract_strided_slice %12 {offsets = [0, 64], sizes = [16, 32], strides = [1, 1]} : vector<16x96xf32> to vector<16x32xf32>
    %16 = vector.extract_strided_slice %13 {offsets = [0, 0], sizes = [8, 32], strides = [1, 1]} : vector<16x32xf32> to vector<8x32xf32>
    %17 = vector.extract_strided_slice %14 {offsets = [0, 0], sizes = [8, 32], strides = [1, 1]} : vector<16x32xf32> to vector<8x32xf32>
    %18 = vector.extract_strided_slice %15 {offsets = [0, 0], sizes = [8, 32], strides = [1, 1]} : vector<16x32xf32> to vector<8x32xf32>
    %19 = vector.extract_strided_slice %16 {offsets = [0, 0], sizes = [8, 8], strides = [1, 1]} : vector<8x32xf32> to vector<8x8xf32>
    %20 = vector.extract_strided_slice %17 {offsets = [0, 0], sizes = [8, 8], strides = [1, 1]} : vector<8x32xf32> to vector<8x8xf32>
    %cst_12 = arith.constant dense<0.000000e+00> : vector<8x8xf32>
    %21 = tpu.matmul %19, %20, %cst_12 {dimension_numbers = #tpu.dot_dimension_numbers<[1], [1], [0], [0], [0, 0, 1, 0], [], []>} : vector<8x8xf32>, vector<8x8xf32>, vector<8x8xf32> -> vector<8x8xf32>
    %cst_13 = arith.constant dense<0xFF800000> : vector<8xf32>
    %22 = vector.multi_reduction <maximumf>, %21, %cst_13 [1] : vector<8x8xf32> to vector<8xf32>
    %23 = vector.shape_cast %22 : vector<8xf32> to vector<8x1xf32>
    %24 = vector.broadcast %23 : vector<8x1xf32> to vector<8x8xf32>
    %25 = arith.subf %21, %24 : vector<8x8xf32>
    %26 = math.exp %25 : vector<8x8xf32>
    %cst_14 = arith.constant dense<0.000000e+00> : vector<8xf32>
    %27 = vector.multi_reduction <add>, %26, %cst_14 [1] : vector<8x8xf32> to vector<8xf32>
    %28 = vector.shape_cast %27 : vector<8xf32> to vector<8x1xf32>
    %29 = tpu.reciprocal %28 {approx = true} : vector<8x1xf32> -> vector<8x1xf32>
    %30 = vector.broadcast %29 : vector<8x1xf32> to vector<8x8xf32>
    %31 = arith.mulf %26, %30 : vector<8x8xf32>
    %c0_15 = arith.constant 0 : index
    %c0_16 = arith.constant 0 : index
    %32 = vector.load %arg8[%c0_15, %c0_16] : memref<16x32xf32, #tpu.memory_space<vmem>>, vector<8x8xf32>
    tpu.vector_store %arg8[%c0_15, %c0_16], %31 {strides = array<i32>} : memref<16x32xf32, #tpu.memory_space<vmem>>, vector<8x8xf32>,
    %33 = vector.extract_strided_slice %18 {offsets = [0, 0], sizes = [8, 8], strides = [1, 1]} : vector<8x32xf32> to vector<8x8xf32>
    %cst_17 = arith.constant dense<0.000000e+00> : vector<8x8xf32>
    %34 = tpu.matmul %31, %33, %cst_17 {dimension_numbers = #tpu.dot_dimension_numbers<[1], [0], [0], [1], [0, 0, 1, 1], [], []>} : vector<8x8xf32>, vector<8x8xf32>, vector<8x8xf32> -> vector<8x8xf32>
    %c0_18 = arith.constant 0 : index
    %c0_19 = arith.constant 0 : index
    %35 = vector.load %arg9[%c0_18, %c0_19] : memref<16x32xf32, #tpu.memory_space<vmem>>, vector<8x8xf32>
    tpu.vector_store %arg9[%c0_18, %c0_19], %34 {strides = array<i32>} : memref<16x32xf32, #tpu.memory_space<vmem>>, vector<8x8xf32>,
    %36 = vector.extract_strided_slice %16 {offsets = [0, 8], sizes = [8, 8], strides = [1, 1]} : vector<8x32xf32> to vector<8x8xf32>
    %37 = vector.extract_strided_slice %17 {offsets = [0, 8], sizes = [8, 8], strides = [1, 1]} : vector<8x32xf32> to vector<8x8xf32>
    %cst_20 = arith.constant dense<0.000000e+00> : vector<8x8xf32>
    %38 = tpu.matmul %36, %37, %cst_20 {dimension_numbers = #tpu.dot_dimension_numbers<[1], [1], [0], [0], [0, 0, 1, 0], [], []>} : vector<8x8xf32>, vector<8x8xf32>, vector<8x8xf32> -> vector<8x8xf32>
    %cst_21 = arith.constant dense<0xFF800000> : vector<8xf32>
    %39 = vector.multi_reduction <maximumf>, %38, %cst_21 [1] : vector<8x8xf32> to vector<8xf32>
    %40 = vector.shape_cast %39 : vector<8xf32> to vector<8x1xf32>
    %41 = vector.broadcast %40 : vector<8x1xf32> to vector<8x8xf32>
    %42 = arith.subf %38, %41 : vector<8x8xf32>
    %43 = math.exp %42 : vector<8x8xf32>
    %cst_22 = arith.constant dense<0.000000e+00> : vector<8xf32>
    %44 = vector.multi_reduction <add>, %43, %cst_22 [1] : vector<8x8xf32> to vector<8xf32>
    %45 = vector.shape_cast %44 : vector<8xf32> to vector<8x1xf32>
    %46 = tpu.reciprocal %45 {approx = true} : vector<8x1xf32> -> vector<8x1xf32>
    %47 = vector.broadcast %46 : vector<8x1xf32> to vector<8x8xf32>
    %48 = arith.mulf %43, %47 : vector<8x8xf32>
    %c0_23 = arith.constant 0 : index
    %c8 = arith.constant 8 : index
    %49 = vector.load %arg8[%c0_23, %c8] : memref<16x32xf32, #tpu.memory_space<vmem>>, vector<8x8xf32>
    tpu.vector_store %arg8[%c0_23, %c8], %48 {strides = array<i32>} : memref<16x32xf32, #tpu.memory_space<vmem>>, vector<8x8xf32>,
    %50 = vector.extract_strided_slice %18 {offsets = [0, 8], sizes = [8, 8], strides = [1, 1]} : vector<8x32xf32> to vector<8x8xf32>
    %cst_24 = arith.constant dense<0.000000e+00> : vector<8x8xf32>
    %51 = tpu.matmul %48, %50, %cst_24 {dimension_numbers = #tpu.dot_dimension_numbers<[1], [0], [0], [1], [0, 0, 1, 1], [], []>} : vector<8x8xf32>, vector<8x8xf32>, vector<8x8xf32> -> vector<8x8xf32>
    %c0_25 = arith.constant 0 : index
    %c8_26 = arith.constant 8 : index
    %52 = vector.load %arg9[%c0_25, %c8_26] : memref<16x32xf32, #tpu.memory_space<vmem>>, vector<8x8xf32>
    tpu.vector_store %arg9[%c0_25, %c8_26], %51 {strides = array<i32>} : memref<16x32xf32, #tpu.memory_space<vmem>>, vector<8x8xf32>,
    %53 = vector.extract_strided_slice %16 {offsets = [0, 16], sizes = [8, 8], strides = [1, 1]} : vector<8x32xf32> to vector<8x8xf32>
    %54 = vector.extract_strided_slice %17 {offsets = [0, 16], sizes = [8, 8], strides = [1, 1]} : vector<8x32xf32> to vector<8x8xf32>
    %cst_27 = arith.constant dense<0.000000e+00> : vector<8x8xf32>
    %55 = tpu.matmul %53, %54, %cst_27 {dimension_numbers = #tpu.dot_dimension_numbers<[1], [1], [0], [0], [0, 0, 1, 0], [], []>} : vector<8x8xf32>, vector<8x8xf32>, vector<8x8xf32> -> vector<8x8xf32>
    %cst_28 = arith.constant dense<0xFF800000> : vector<8xf32>
    %56 = vector.multi_reduction <maximumf>, %55, %cst_28 [1] : vector<8x8xf32> to vector<8xf32>
    %57 = vector.shape_cast %56 : vector<8xf32> to vector<8x1xf32>
    %58 = vector.broadcast %57 : vector<8x1xf32> to vector<8x8xf32>
    %59 = arith.subf %55, %58 : vector<8x8xf32>
    %60 = math.exp %59 : vector<8x8xf32>
    %cst_29 = arith.constant dense<0.000000e+00> : vector<8xf32>
    %61 = vector.multi_reduction <add>, %60, %cst_29 [1] : vector<8x8xf32> to vector<8xf32>
    %62 = vector.shape_cast %61 : vector<8xf32> to vector<8x1xf32>
    %63 = tpu.reciprocal %62 {approx = true} : vector<8x1xf32> -> vector<8x1xf32>
    %64 = vector.broadcast %63 : vector<8x1xf32> to vector<8x8xf32>
    %65 = arith.mulf %60, %64 : vector<8x8xf32>
    %c0_30 = arith.constant 0 : index
    %c16 = arith.constant 16 : index
    %66 = vector.load %arg8[%c0_30, %c16] : memref<16x32xf32, #tpu.memory_space<vmem>>, vector<8x8xf32>
    tpu.vector_store %arg8[%c0_30, %c16], %65 {strides = array<i32>} : memref<16x32xf32, #tpu.memory_space<vmem>>, vector<8x8xf32>,
    %67 = vector.extract_strided_slice %18 {offsets = [0, 16], sizes = [8, 8], strides = [1, 1]} : vector<8x32xf32> to vector<8x8xf32>
    %cst_31 = arith.constant dense<0.000000e+00> : vector<8x8xf32>
    %68 = tpu.matmul %65, %67, %cst_31 {dimension_numbers = #tpu.dot_dimension_numbers<[1], [0], [0], [1], [0, 0, 1, 1], [], []>} : vector<8x8xf32>, vector<8x8xf32>, vector<8x8xf32> -> vector<8x8xf32>
    %c0_32 = arith.constant 0 : index
    %c16_33 = arith.constant 16 : index
    %69 = vector.load %arg9[%c0_32, %c16_33] : memref<16x32xf32, #tpu.memory_space<vmem>>, vector<8x8xf32>
    tpu.vector_store %arg9[%c0_32, %c16_33], %68 {strides = array<i32>} : memref<16x32xf32, #tpu.memory_space<vmem>>, vector<8x8xf32>,
    %70 = vector.extract_strided_slice %16 {offsets = [0, 24], sizes = [8, 8], strides = [1, 1]} : vector<8x32xf32> to vector<8x8xf32>
    %71 = vector.extract_strided_slice %17 {offsets = [0, 24], sizes = [8, 8], strides = [1, 1]} : vector<8x32xf32> to vector<8x8xf32>
    %cst_34 = arith.constant dense<0.000000e+00> : vector<8x8xf32>
    %72 = tpu.matmul %70, %71, %cst_34 {dimension_numbers = #tpu.dot_dimension_numbers<[1], [1], [0], [0], [0, 0, 1, 0], [], []>} : vector<8x8xf32>, vector<8x8xf32>, vector<8x8xf32> -> vector<8x8xf32>
    %cst_35 = arith.constant dense<0xFF800000> : vector<8xf32>
    %73 = vector.multi_reduction <maximumf>, %72, %cst_35 [1] : vector<8x8xf32> to vector<8xf32>
    %74 = vector.shape_cast %73 : vector<8xf32> to vector<8x1xf32>
    %75 = vector.broadcast %74 : vector<8x1xf32> to vector<8x8xf32>
    %76 = arith.subf %72, %75 : vector<8x8xf32>
    %77 = math.exp %76 : vector<8x8xf32>
    %cst_36 = arith.constant dense<0.000000e+00> : vector<8xf32>
    %78 = vector.multi_reduction <add>, %77, %cst_36 [1] : vector<8x8xf32> to vector<8xf32>
    %79 = vector.shape_cast %78 : vector<8xf32> to vector<8x1xf32>
    %80 = tpu.reciprocal %79 {approx = true} : vector<8x1xf32> -> vector<8x1xf32>
    %81 = vector.broadcast %80 : vector<8x1xf32> to vector<8x8xf32>
    %82 = arith.mulf %77, %81 : vector<8x8xf32>
    %c0_37 = arith.constant 0 : index
    %c24 = arith.constant 24 : index
    %83 = vector.load %arg8[%c0_37, %c24] : memref<16x32xf32, #tpu.memory_space<vmem>>, vector<8x8xf32>
    tpu.vector_store %arg8[%c0_37, %c24], %82 {strides = array<i32>} : memref<16x32xf32, #tpu.memory_space<vmem>>, vector<8x8xf32>,
    %84 = vector.extract_strided_slice %18 {offsets = [0, 24], sizes = [8, 8], strides = [1, 1]} : vector<8x32xf32> to vector<8x8xf32>
    %cst_38 = arith.constant dense<0.000000e+00> : vector<8x8xf32>
    %85 = tpu.matmul %82, %84, %cst_38 {dimension_numbers = #tpu.dot_dimension_numbers<[1], [0], [0], [1], [0, 0, 1, 1], [], []>} : vector<8x8xf32>, vector<8x8xf32>, vector<8x8xf32> -> vector<8x8xf32>
    %c0_39 = arith.constant 0 : index
    %c24_40 = arith.constant 24 : index
    %86 = vector.load %arg9[%c0_39, %c24_40] : memref<16x32xf32, #tpu.memory_space<vmem>>, vector<8x8xf32>
    tpu.vector_store %arg9[%c0_39, %c24_40], %85 {strides = array<i32>} : memref<16x32xf32, #tpu.memory_space<vmem>>, vector<8x8xf32>,
    %87 = vector.extract_strided_slice %13 {offsets = [8, 0], sizes = [8, 32], strides = [1, 1]} : vector<16x32xf32> to vector<8x32xf32>
    %88 = vector.extract_strided_slice %14 {offsets = [8, 0], sizes = [8, 32], strides = [1, 1]} : vector<16x32xf32> to vector<8x32xf32>
    %89 = vector.extract_strided_slice %15 {offsets = [8, 0], sizes = [8, 32], strides = [1, 1]} : vector<16x32xf32> to vector<8x32xf32>
    %90 = vector.extract_strided_slice %87 {offsets = [0, 0], sizes = [8, 8], strides = [1, 1]} : vector<8x32xf32> to vector<8x8xf32>
    %91 = vector.extract_strided_slice %88 {offsets = [0, 0], sizes = [8, 8], strides = [1, 1]} : vector<8x32xf32> to vector<8x8xf32>
    %cst_41 = arith.constant dense<0.000000e+00> : vector<8x8xf32>
    %92 = tpu.matmul %90, %91, %cst_41 {dimension_numbers = #tpu.dot_dimension_numbers<[1], [1], [0], [0], [0, 0, 1, 0], [], []>} : vector<8x8xf32>, vector<8x8xf32>, vector<8x8xf32> -> vector<8x8xf32>
    %cst_42 = arith.constant dense<0xFF800000> : vector<8xf32>
    %93 = vector.multi_reduction <maximumf>, %92, %cst_42 [1] : vector<8x8xf32> to vector<8xf32>
    %94 = vector.shape_cast %93 : vector<8xf32> to vector<8x1xf32>
    %95 = vector.broadcast %94 : vector<8x1xf32> to vector<8x8xf32>
    %96 = arith.subf %92, %95 : vector<8x8xf32>
    %97 = math.exp %96 : vector<8x8xf32>
    %cst_43 = arith.constant dense<0.000000e+00> : vector<8xf32>
    %98 = vector.multi_reduction <add>, %97, %cst_43 [1] : vector<8x8xf32> to vector<8xf32>
    %99 = vector.shape_cast %98 : vector<8xf32> to vector<8x1xf32>
    %100 = tpu.reciprocal %99 {approx = true} : vector<8x1xf32> -> vector<8x1xf32>
    %101 = vector.broadcast %100 : vector<8x1xf32> to vector<8x8xf32>
    %102 = arith.mulf %97, %101 : vector<8x8xf32>
    %c8_44 = arith.constant 8 : index
    %c0_45 = arith.constant 0 : index
    %103 = vector.load %arg8[%c8_44, %c0_45] : memref<16x32xf32, #tpu.memory_space<vmem>>, vector<8x8xf32>
    tpu.vector_store %arg8[%c8_44, %c0_45], %102 {strides = array<i32>} : memref<16x32xf32, #tpu.memory_space<vmem>>, vector<8x8xf32>,
    %104 = vector.extract_strided_slice %89 {offsets = [0, 0], sizes = [8, 8], strides = [1, 1]} : vector<8x32xf32> to vector<8x8xf32>
    %cst_46 = arith.constant dense<0.000000e+00> : vector<8x8xf32>
    %105 = tpu.matmul %102, %104, %cst_46 {dimension_numbers = #tpu.dot_dimension_numbers<[1], [0], [0], [1], [0, 0, 1, 1], [], []>} : vector<8x8xf32>, vector<8x8xf32>, vector<8x8xf32> -> vector<8x8xf32>
    %c8_47 = arith.constant 8 : index
    %c0_48 = arith.constant 0 : index
    %106 = vector.load %arg9[%c8_47, %c0_48] : memref<16x32xf32, #tpu.memory_space<vmem>>, vector<8x8xf32>
    tpu.vector_store %arg9[%c8_47, %c0_48], %105 {strides = array<i32>} : memref<16x32xf32, #tpu.memory_space<vmem>>, vector<8x8xf32>,
    %107 = vector.extract_strided_slice %87 {offsets = [0, 8], sizes = [8, 8], strides = [1, 1]} : vector<8x32xf32> to vector<8x8xf32>
    %108 = vector.extract_strided_slice %88 {offsets = [0, 8], sizes = [8, 8], strides = [1, 1]} : vector<8x32xf32> to vector<8x8xf32>
    %cst_49 = arith.constant dense<0.000000e+00> : vector<8x8xf32>
    %109 = tpu.matmul %107, %108, %cst_49 {dimension_numbers = #tpu.dot_dimension_numbers<[1], [1], [0], [0], [0, 0, 1, 0], [], []>} : vector<8x8xf32>, vector<8x8xf32>, vector<8x8xf32> -> vector<8x8xf32>
    %cst_50 = arith.constant dense<0xFF800000> : vector<8xf32>
    %110 = vector.multi_reduction <maximumf>, %109, %cst_50 [1] : vector<8x8xf32> to vector<8xf32>
    %111 = vector.shape_cast %110 : vector<8xf32> to vector<8x1xf32>
    %112 = vector.broadcast %111 : vector<8x1xf32> to vector<8x8xf32>
    %113 = arith.subf %109, %112 : vector<8x8xf32>
    %114 = math.exp %113 : vector<8x8xf32>
    %cst_51 = arith.constant dense<0.000000e+00> : vector<8xf32>
    %115 = vector.multi_reduction <add>, %114, %cst_51 [1] : vector<8x8xf32> to vector<8xf32>
    %116 = vector.shape_cast %115 : vector<8xf32> to vector<8x1xf32>
    %117 = tpu.reciprocal %116 {approx = true} : vector<8x1xf32> -> vector<8x1xf32>
    %118 = vector.broadcast %117 : vector<8x1xf32> to vector<8x8xf32>
    %119 = arith.mulf %114, %118 : vector<8x8xf32>
    %c8_52 = arith.constant 8 : index
    %c8_53 = arith.constant 8 : index
    %120 = vector.load %arg8[%c8_52, %c8_53] : memref<16x32xf32, #tpu.memory_space<vmem>>, vector<8x8xf32>
    tpu.vector_store %arg8[%c8_52, %c8_53], %119 {strides = array<i32>} : memref<16x32xf32, #tpu.memory_space<vmem>>, vector<8x8xf32>,
    %121 = vector.extract_strided_slice %89 {offsets = [0, 8], sizes = [8, 8], strides = [1, 1]} : vector<8x32xf32> to vector<8x8xf32>
    %cst_54 = arith.constant dense<0.000000e+00> : vector<8x8xf32>
    %122 = tpu.matmul %119, %121, %cst_54 {dimension_numbers = #tpu.dot_dimension_numbers<[1], [0], [0], [1], [0, 0, 1, 1], [], []>} : vector<8x8xf32>, vector<8x8xf32>, vector<8x8xf32> -> vector<8x8xf32>
    %c8_55 = arith.constant 8 : index
    %c8_56 = arith.constant 8 : index
    %123 = vector.load %arg9[%c8_55, %c8_56] : memref<16x32xf32, #tpu.memory_space<vmem>>, vector<8x8xf32>
    tpu.vector_store %arg9[%c8_55, %c8_56], %122 {strides = array<i32>} : memref<16x32xf32, #tpu.memory_space<vmem>>, vector<8x8xf32>,
    %124 = vector.extract_strided_slice %87 {offsets = [0, 16], sizes = [8, 8], strides = [1, 1]} : vector<8x32xf32> to vector<8x8xf32>
    %125 = vector.extract_strided_slice %88 {offsets = [0, 16], sizes = [8, 8], strides = [1, 1]} : vector<8x32xf32> to vector<8x8xf32>
    %cst_57 = arith.constant dense<0.000000e+00> : vector<8x8xf32>
    %126 = tpu.matmul %124, %125, %cst_57 {dimension_numbers = #tpu.dot_dimension_numbers<[1], [1], [0], [0], [0, 0, 1, 0], [], []>} : vector<8x8xf32>, vector<8x8xf32>, vector<8x8xf32> -> vector<8x8xf32>
    %cst_58 = arith.constant dense<0xFF800000> : vector<8xf32>
    %127 = vector.multi_reduction <maximumf>, %126, %cst_58 [1] : vector<8x8xf32> to vector<8xf32>
    %128 = vector.shape_cast %127 : vector<8xf32> to vector<8x1xf32>
    %129 = vector.broadcast %128 : vector<8x1xf32> to vector<8x8xf32>
    %130 = arith.subf %126, %129 : vector<8x8xf32>
    %131 = math.exp %130 : vector<8x8xf32>
    %cst_59 = arith.constant dense<0.000000e+00> : vector<8xf32>
    %132 = vector.multi_reduction <add>, %131, %cst_59 [1] : vector<8x8xf32> to vector<8xf32>
    %133 = vector.shape_cast %132 : vector<8xf32> to vector<8x1xf32>
    %134 = tpu.reciprocal %133 {approx = true} : vector<8x1xf32> -> vector<8x1xf32>
    %135 = vector.broadcast %134 : vector<8x1xf32> to vector<8x8xf32>
    %136 = arith.mulf %131, %135 : vector<8x8xf32>
    %c8_60 = arith.constant 8 : index
    %c16_61 = arith.constant 16 : index
    %137 = vector.load %arg8[%c8_60, %c16_61] : memref<16x32xf32, #tpu.memory_space<vmem>>, vector<8x8xf32>
    tpu.vector_store %arg8[%c8_60, %c16_61], %136 {strides = array<i32>} : memref<16x32xf32, #tpu.memory_space<vmem>>, vector<8x8xf32>,
    %138 = vector.extract_strided_slice %89 {offsets = [0, 16], sizes = [8, 8], strides = [1, 1]} : vector<8x32xf32> to vector<8x8xf32>
    %cst_62 = arith.constant dense<0.000000e+00> : vector<8x8xf32>
    %139 = tpu.matmul %136, %138, %cst_62 {dimension_numbers = #tpu.dot_dimension_numbers<[1], [0], [0], [1], [0, 0, 1, 1], [], []>} : vector<8x8xf32>, vector<8x8xf32>, vector<8x8xf32> -> vector<8x8xf32>
    %c8_63 = arith.constant 8 : index
    %c16_64 = arith.constant 16 : index
    %140 = vector.load %arg9[%c8_63, %c16_64] : memref<16x32xf32, #tpu.memory_space<vmem>>, vector<8x8xf32>
    tpu.vector_store %arg9[%c8_63, %c16_64], %139 {strides = array<i32>} : memref<16x32xf32, #tpu.memory_space<vmem>>, vector<8x8xf32>,
    %141 = vector.extract_strided_slice %87 {offsets = [0, 24], sizes = [8, 8], strides = [1, 1]} : vector<8x32xf32> to vector<8x8xf32>
    %142 = vector.extract_strided_slice %88 {offsets = [0, 24], sizes = [8, 8], strides = [1, 1]} : vector<8x32xf32> to vector<8x8xf32>
    %cst_65 = arith.constant dense<0.000000e+00> : vector<8x8xf32>
    %143 = tpu.matmul %141, %142, %cst_65 {dimension_numbers = #tpu.dot_dimension_numbers<[1], [1], [0], [0], [0, 0, 1, 0], [], []>} : vector<8x8xf32>, vector<8x8xf32>, vector<8x8xf32> -> vector<8x8xf32>
    %cst_66 = arith.constant dense<0xFF800000> : vector<8xf32>
    %144 = vector.multi_reduction <maximumf>, %143, %cst_66 [1] : vector<8x8xf32> to vector<8xf32>
    %145 = vector.shape_cast %144 : vector<8xf32> to vector<8x1xf32>
    %146 = vector.broadcast %145 : vector<8x1xf32> to vector<8x8xf32>
    %147 = arith.subf %143, %146 : vector<8x8xf32>
    %148 = math.exp %147 : vector<8x8xf32>
    %cst_67 = arith.constant dense<0.000000e+00> : vector<8xf32>
    %149 = vector.multi_reduction <add>, %148, %cst_67 [1] : vector<8x8xf32> to vector<8xf32>
    %150 = vector.shape_cast %149 : vector<8xf32> to vector<8x1xf32>
    %151 = tpu.reciprocal %150 {approx = true} : vector<8x1xf32> -> vector<8x1xf32>
    %152 = vector.broadcast %151 : vector<8x1xf32> to vector<8x8xf32>
    %153 = arith.mulf %148, %152 : vector<8x8xf32>
    %c8_68 = arith.constant 8 : index
    %c24_69 = arith.constant 24 : index
    %154 = vector.load %arg8[%c8_68, %c24_69] : memref<16x32xf32, #tpu.memory_space<vmem>>, vector<8x8xf32>
    tpu.vector_store %arg8[%c8_68, %c24_69], %153 {strides = array<i32>} : memref<16x32xf32, #tpu.memory_space<vmem>>, vector<8x8xf32>,
    %155 = vector.extract_strided_slice %89 {offsets = [0, 24], sizes = [8, 8], strides = [1, 1]} : vector<8x32xf32> to vector<8x8xf32>
    %cst_70 = arith.constant dense<0.000000e+00> : vector<8x8xf32>
    %156 = tpu.matmul %153, %155, %cst_70 {dimension_numbers = #tpu.dot_dimension_numbers<[1], [0], [0], [1], [0, 0, 1, 1], [], []>} : vector<8x8xf32>, vector<8x8xf32>, vector<8x8xf32> -> vector<8x8xf32>
    %c8_71 = arith.constant 8 : index
    %c24_72 = arith.constant 24 : index
    %157 = vector.load %arg9[%c8_71, %c24_72] : memref<16x32xf32, #tpu.memory_space<vmem>>, vector<8x8xf32>
    tpu.vector_store %arg9[%c8_71, %c24_72], %156 {strides = array<i32>} : memref<16x32xf32, #tpu.memory_space<vmem>>, vector<8x8xf32>,
    %c0_73 = arith.constant 0 : index
    %c0_74 = arith.constant 0 : index
    %158 = vector.load %arg9[%c0_73, %c0_74] : memref<16x32xf32, #tpu.memory_space<vmem>>, vector<16x32xf32>
    %c0_75 = arith.constant 0 : index
    %c0_76 = arith.constant 0 : index
    %159 = vector.load %arg3[%c0_75, %c0_76] : memref<32x32xf32, #tpu.memory_space<vmem>>, vector<32x32xf32>
    %cst_77 = arith.constant dense<0.000000e+00> : vector<16x32xf32>
    %160 = tpu.matmul %158, %159, %cst_77 {dimension_numbers = #tpu.dot_dimension_numbers<[1], [0], [0], [1], [0, 0, 1, 1], [], []>} : vector<16x32xf32>, vector<32x32xf32>, vector<16x32xf32> -> vector<16x32xf32>
    %161 = vector.broadcast %1 : vector<1x32xf32> to vector<16x32xf32>
    %162 = arith.addf %160, %161 : vector<16x32xf32>
    %163 = arith.addf %8, %162 : vector<16x32xf32>
    %cst_78 = arith.constant dense<0.000000e+00> : vector<16xf32>
    %164 = vector.multi_reduction <add>, %163, %cst_78 [1] : vector<16x32xf32> to vector<16xf32>
    %165 = vector.shape_cast %164 : vector<16xf32> to vector<16x1xf32>
    %cst_79 = arith.constant 3.200000e+01 : f32
    %166 = vector.broadcast %cst_79 : f32 to vector<16x1xf32>
    %167 = arith.divf %165, %166 : vector<16x1xf32>
    %168 = vector.broadcast %167 : vector<16x1xf32> to vector<16x32xf32>
    %169 = arith.subf %163, %168 : vector<16x32xf32>
    %170 = arith.mulf %169, %169 : vector<16x32xf32>
    %cst_80 = arith.constant dense<0.000000e+00> : vector<16xf32>
    %171 = vector.multi_reduction <add>, %170, %cst_80 [1] : vector<16x32xf32> to vector<16xf32>
    %172 = vector.shape_cast %171 : vector<16xf32> to vector<16x1xf32>
    %cst_81 = arith.constant 3.200000e+01 : f32
    %173 = vector.broadcast %cst_81 : f32 to vector<16x1xf32>
    %174 = arith.divf %172, %173 : vector<16x1xf32>
    %175 = vector.broadcast %167 : vector<16x1xf32> to vector<16x32xf32>
    %176 = arith.subf %163, %175 : vector<16x32xf32>
    %cst_82 = arith.constant 9.99999974E-6 : f32
    %177 = vector.broadcast %cst_82 : f32 to vector<16x1xf32>
    %178 = arith.addf %174, %177 : vector<16x1xf32>
    %179 = math.rsqrt %178 : vector<16x1xf32>
    %180 = vector.broadcast %179 : vector<16x1xf32> to vector<16x32xf32>
    %181 = arith.mulf %176, %180 : vector<16x32xf32>
    %182 = vector.broadcast %4 : vector<1x32xf32> to vector<16x32xf32>
    %183 = arith.mulf %181, %182 : vector<16x32xf32>
    %184 = vector.broadcast %5 : vector<1x32xf32> to vector<16x32xf32>
    %185 = arith.addf %183, %184 : vector<16x32xf32>
    %c0_83 = arith.constant 0 : index
    %c0_84 = arith.constant 0 : index
    %186 = vector.load %arg4[%c0_83, %c0_84] : memref<32x64xf32, #tpu.memory_space<vmem>>, vector<32x64xf32>
    %cst_85 = arith.constant dense<0.000000e+00> : vector<16x64xf32>
    %187 = tpu.matmul %185, %186, %cst_85 {dimension_numbers = #tpu.dot_dimension_numbers<[1], [0], [0], [1], [0, 0, 1, 1], [], []>} : vector<16x32xf32>, vector<32x64xf32>, vector<16x64xf32> -> vector<16x64xf32>
    %188 = vector.broadcast %2 : vector<1x64xf32> to vector<16x64xf32>
    %189 = arith.addf %187, %188 : vector<16x64xf32>
    %cst_86 = arith.constant 0.000000e+00 : f32
    %190 = vector.broadcast %cst_86 : f32 to vector<16x64xf32>
    %191 = arith.maximumf %189, %190 : vector<16x64xf32>
    %c0_87 = arith.constant 0 : index
    %c0_88 = arith.constant 0 : index
    %192 = vector.load %arg5[%c0_87, %c0_88] : memref<64x32xf32, #tpu.memory_space<vmem>>, vector<64x32xf32>
    %cst_89 = arith.constant dense<0.000000e+00> : vector<16x32xf32>
    %193 = tpu.matmul %191, %192, %cst_89 {dimension_numbers = #tpu.dot_dimension_numbers<[1], [0], [0], [1], [0, 0, 1, 1], [], []>} : vector<16x64xf32>, vector<64x32xf32>, vector<16x32xf32> -> vector<16x32xf32>
    %194 = vector.broadcast %3 : vector<1x32xf32> to vector<16x32xf32>
    %195 = arith.addf %193, %194 : vector<16x32xf32>
    %196 = arith.addf %185, %195 : vector<16x32xf32>
    %cst_90 = arith.constant dense<0.000000e+00> : vector<16xf32>
    %197 = vector.multi_reduction <add>, %196, %cst_90 [1] : vector<16x32xf32> to vector<16xf32>
    %198 = vector.shape_cast %197 : vector<16xf32> to vector<16x1xf32>
    %cst_91 = arith.constant 3.200000e+01 : f32
    %199 = vector.broadcast %cst_91 : f32 to vector<16x1xf32>
    %200 = arith.divf %198, %199 : vector<16x1xf32>
    %201 = vector.broadcast %200 : vector<16x1xf32> to vector<16x32xf32>
    %202 = arith.subf %196, %201 : vector<16x32xf32>
    %203 = arith.mulf %202, %202 : vector<16x32xf32>
    %cst_92 = arith.constant dense<0.000000e+00> : vector<16xf32>
    %204 = vector.multi_reduction <add>, %203, %cst_92 [1] : vector<16x32xf32> to vector<16xf32>
    %205 = vector.shape_cast %204 : vector<16xf32> to vector<16x1xf32>
    %cst_93 = arith.constant 3.200000e+01 : f32
    %206 = vector.broadcast %cst_93 : f32 to vector<16x1xf32>
    %207 = arith.divf %205, %206 : vector<16x1xf32>
    %208 = vector.broadcast %200 : vector<16x1xf32> to vector<16x32xf32>
    %209 = arith.subf %196, %208 : vector<16x32xf32>
    %cst_94 = arith.constant 9.99999974E-6 : f32
    %210 = vector.broadcast %cst_94 : f32 to vector<16x1xf32>
    %211 = arith.addf %207, %210 : vector<16x1xf32>
    %212 = math.rsqrt %211 : vector<16x1xf32>
    %213 = vector.broadcast %212 : vector<16x1xf32> to vector<16x32xf32>
    %214 = arith.mulf %209, %213 : vector<16x32xf32>
    %215 = vector.broadcast %6 : vector<1x32xf32> to vector<16x32xf32>
    %216 = arith.mulf %214, %215 : vector<16x32xf32>
    %217 = vector.broadcast %7 : vector<1x32xf32> to vector<16x32xf32>
    %218 = arith.addf %216, %217 : vector<16x32xf32>
    %c0_95 = arith.constant 0 : index
    %c0_96 = arith.constant 0 : index
    %219 = vector.load %arg7[%c0_95, %c0_96] : memref<16x32xf32, #tpu.memory_space<vmem>>, vector<16x32xf32>
    tpu.vector_store %arg7[%c0_95, %c0_96], %218 {strides = array<i32>} : memref<16x32xf32, #tpu.memory_space<vmem>>, vector<16x32xf32>,
    return
  }
  func.func @transform_0(%arg0: i32) -> (i32, i32) {
    %c0_i32 = arith.constant 0 : i32
    %c0_i32_0 = arith.constant 0 : i32
    return %arg0, %c0_i32 : i32, i32
  }
  func.func @transform_1(%arg0: i32) -> (i32, i32) {
    %c0_i32 = arith.constant 0 : i32
    %c0_i32_0 = arith.constant 0 : i32
    %c0_i32_1 = arith.constant 0 : i32
    return %c0_i32, %c0_i32_0 : i32, i32
  }
  func.func @transform_2(%arg0: i32) -> (i32, i32) {
    %c0_i32 = arith.constant 0 : i32
    %c0_i32_0 = arith.constant 0 : i32
    %c0_i32_1 = arith.constant 0 : i32
    return %c0_i32, %c0_i32_0 : i32, i32
  }
  func.func @transform_3(%arg0: i32) -> (i32, i32) {
    %c0_i32 = arith.constant 0 : i32
    %c0_i32_0 = arith.constant 0 : i32
    %c0_i32_1 = arith.constant 0 : i32
    return %c0_i32, %c0_i32_0 : i32, i32
  }
  func.func @transform_4(%arg0: i32) -> (i32, i32) {
    %c0_i32 = arith.constant 0 : i32
    %c0_i32_0 = arith.constant 0 : i32
    %c0_i32_1 = arith.constant 0 : i32
    return %c0_i32, %c0_i32_0 : i32, i32
  }
  func.func @transform_5(%arg0: i32) -> (i32, i32) {
    %c0_i32 = arith.constant 0 : i32
    %c0_i32_0 = arith.constant 0 : i32
    %c0_i32_1 = arith.constant 0 : i32
    return %c0_i32, %c0_i32_0 : i32, i32
  }
  func.func @transform_6(%arg0: i32) -> (i32, i32) {
    %c0_i32 = arith.constant 0 : i32
    %c0_i32_0 = arith.constant 0 : i32
    return %arg0, %c0_i32 : i32, i32
  }
  func.func @transform_7(%arg0: i32) -> (i32, i32) {
    %c0_i32 = arith.constant 0 : i32
    %c0_i32_0 = arith.constant 0 : i32
    return %arg0, %c0_i32 : i32, i32
  }
}

</mosaic_0001>

<llo_original>
// kernel: tpu_custom_call.1
$region0: #{tpu_custom_call.1}
  #allocation0 [shape = 'u32[]', space=smem, size = 0x4, offset = 0x4, fixed_abs, tag = 'smem constant byte address 0x4 - core index']
  #allocation1 [shape = 'u32[144,128]{1,0:T(1,128)}', space=vmem, size = 0x12000, scoped, tag = 'internal scratch']
  #allocation2 [shape = 'f32[16,32]{1,0:T(8,128)}', space=vmem, size = 0x2000, scoped, tag = 'scratch operand']
  %s0 = inlined_call_operand.hbm [shape: f32[16,32], index: 0, kind: input, shape index: {}]
  %s1 = inlined_call_operand.vmem [shape: f32[32,96], index: 1, kind: input, shape index: {}]
  %s2 = inlined_call_operand.vmem [shape: f32[32,32], index: 2, kind: input, shape index: {}]
  %s3 = inlined_call_operand.vmem [shape: f32[32,64], index: 3, kind: input, shape index: {}]
  %s4 = inlined_call_operand.vmem [shape: f32[64,32], index: 4, kind: input, shape index: {}]
  %s5 = inlined_call_operand.vmem [shape: f32[8,128], index: 5, kind: input, shape index: {}]
  %s6 = inlined_call_operand.hbm [shape: f32[16,32], index: 6, kind: output, shape index: {0}]
  %s7 = inlined_call_operand.hbm [shape: f32[16,32], index: 7, kind: output, shape index: {1}]
  %8 = xla_tuple %s6, %s7
  %s9 = sld [smem:[#allocation0]]
  $region46: #{tpu_custom_call.1} parent=0
    _
  %s11 = ssub.s32 1, %s9
  %s12 = scalar_select 0, %s11, %s9
  $region1: #{tpu_custom_call.1} parent=0
    #allocation3 [shape = 'u8[8192]{0}', space=vmem, size = 0x2000, scoped, tag = 'input window, operand 0, single buffered']
    #allocation4 [shape = 's32[1]{0}', space=sflag, size = 0x4, scoped, tag = 'scoped memory for tpu_custom_call.1']
    #allocation5 [shape = 's32[1]{0}', space=sflag, size = 0x4, scoped, tag = 'scoped memory for tpu_custom_call.1']
    #allocation6 [shape = 'u8[8192]{0}', space=vmem, size = 0x2000, scoped, tag = 'output window, operand 0, single buffered']
    #allocation7 [shape = 'u8[8192]{0}', space=vmem, size = 0x2000, scoped, tag = 'output window, operand 1, single buffered']
    #allocation8 [shape = 's32[1]{0}', space=sflag, size = 0x4, scoped, tag = 'scoped memory for tpu_custom_call.1']
    %13 = vsyncpa [#allocation4], 0
    %14 = vsyncpa [#allocation5], 0
    %15 = vsyncpa [#allocation8], 0
    // Predicated region
    $region2: #{tpu_custom_call.1} parent=1 // pred_check
      _
    $region3: #{tpu_custom_call.1} parent=1 // pred_check_branch
      %17 = sbr.rel (0) target = $region5
    $region4: #{tpu_custom_call.1} parent=1 // pred_region
      %s19 = ssub.s32 256, 256
      %20 = vsyncadd [#allocation4], %s19
      %s21 = sshll.u32 [#allocation3], 4
      %s22 = int_to_ptr.vmem [resolvable:$true] %s21
      %27 = dma.hbm_to_vmem [thread:$0]  %s0, 256, %s22, [#allocation4], 128, 128, 8
    $region5: #{tpu_custom_call.1} parent=1 // pred_fallthru
      _
    // Predicated region
    $region6: #{tpu_custom_call.1} parent=1 // pred_check
      _
    $region7: #{tpu_custom_call.1} parent=1 // pred_check_branch
      %29 = sbr.rel (0) target = $region9
    $region8: #{tpu_custom_call.1} parent=1 // pred_region
      _
    $region9: #{tpu_custom_call.1} parent=1 // pred_fallthru
      _
    // Predicated region
    $region10: #{tpu_custom_call.1} parent=1 // pred_check
      _
    $region11: #{tpu_custom_call.1} parent=1 // pred_check_branch
      %31 = sbr.rel (0) target = $region13
    $region12: #{tpu_custom_call.1} parent=1 // pred_region
      _
    $region13: #{tpu_custom_call.1} parent=1 // pred_fallthru
      _
    // Predicated region
    $region14: #{tpu_custom_call.1} parent=1 // pred_check
      _
    $region15: #{tpu_custom_call.1} parent=1 // pred_check_branch
      %33 = sbr.rel (0) target = $region17
    $region16: #{tpu_custom_call.1} parent=1 // pred_region
      _
    $region17: #{tpu_custom_call.1} parent=1 // pred_fallthru
      _
    // Predicated region
    $region18: #{tpu_custom_call.1} parent=1 // pred_check
      _
    $region19: #{tpu_custom_call.1} parent=1 // pred_check_branch
      %35 = sbr.rel (0) target = $region21
    $region20: #{tpu_custom_call.1} parent=1 // pred_region
      _
    $region21: #{tpu_custom_call.1} parent=1 // pred_fallthru
      _
    // Predicated region
    $region22: #{tpu_custom_call.1} parent=1 // pred_check
      _
    $region23: #{tpu_custom_call.1} parent=1 // pred_check_branch
      %37 = sbr.rel (0) target = $region25
    $region24: #{tpu_custom_call.1} parent=1 // pred_region
      _
    $region25: #{tpu_custom_call.1} parent=1 // pred_fallthru
      _
    // Predicated region
    $region26: #{tpu_custom_call.1} parent=1 // pred_check
      _
    $region27: #{tpu_custom_call.1} parent=1 // pred_check_branch
      %39 = sbr.rel (0) target = $region29
    $region28: #{tpu_custom_call.1} parent=1 // pred_region
      %40 = dma.done [#allocation4], 256
    $region29: #{tpu_custom_call.1} parent=1 // pred_fallthru
      _
    %v41 = vld [vmem:[%s5] sm:$0x1]
    %v42 = vld [vmem:[%s5 + $0x1] sm:$0x1]
    %v43 = vld [vmem:[%s5 + $0x2] sm:$0x1]
    %v44 = vld [vmem:[%s5 + $0x3] sm:$0x1]
    %v45 = vld [vmem:[%s5 + $0x4] sm:$0x1]
    %v46 = vld [vmem:[%s5 + $0x5] sm:$0x1]
    %v47 = vld [vmem:[%s5 + $0x6] sm:$0x1]
    %v48 = vld [vmem:[%s5 + $0x7] sm:$0x1]
    %v49 = vld [vmem:[#allocation3] sm:$0xff]
    %v50 = vld [vmem:[#allocation3 + $0x8] sm:$0xff]
    %v51 = vld [vmem:[%s1] sm:$0xff]
    %v52 = vld [vmem:[%s1 + $0x8] sm:$0xff]
    %v53 = vld [vmem:[%s1 + $0x10] sm:$0xff]
    %v54 = vld [vmem:[%s1 + $0x18] sm:$0xff]
    %v55 = vlaneseq
    %v56 = vshrl.u32 %v55, 7
    %v57 = vsub.s32 0, %v56
    %v58 = vrot.slane %v41, %v57
    %vm59 = vcmask 261120
    %v61 = vsel %vm59, %v49, 0
    %v64 = vsel %vm59, %v50, 0
    %66 = vmatprep.subr.mxu0 0.0
    %67 = vmatpush1.msra.mxu0 %v51
    %68 = vmatprep.subr.mxu0 0.0
    %69 = vmatpush1.msra.mxu0 %v52
    %70 = vmatprep.subr.mxu0 0.0
    %71 = vmatpush1.msra.mxu0 %v53
    %72 = vmatprep.subr.mxu0 0.0
    %73 = vmatpush1.msra.mxu0 %v54
    %74 = vmatprep.subr.mxu0 0.0
    %75 = vmatpush1.msra.mxu0 0.0
    %76 = vmatprep.subr.mxu0 0.0
    %77 = vmatpush1.msra.mxu0 0.0
    %78 = vmatprep.subr.mxu0 0.0
    %79 = vmatpush1.msra.mxu0 0.0
    %80 = vmatprep.subr.mxu0 0.0
    %81 = vmatpush1.msra.mxu0 0.0
    %82 = vmatprep.subr.mxu0 0.0
    %83 = vmatpush1.msra.mxu0 0.0
    %84 = vmatprep.subr.mxu0 0.0
    %85 = vmatpush1.msra.mxu0 0.0
    %86 = vmatprep.subr.mxu0 0.0
    %87 = vmatpush1.msra.mxu0 0.0
    %88 = vmatprep.subr.mxu0 0.0
    %89 = vmatpush1.msra.mxu0 0.0
    %90 = vmatprep.subr.mxu0 0.0
    %91 = vmatpush1.msra.mxu0 0.0
    %92 = vmatprep.subr.mxu0 0.0
    %93 = vmatpush1.msra.mxu0 0.0
    %94 = vmatprep.subr.mxu0 0.0
    %95 = vmatpush1.msra.mxu0 0.0
    %96 = vmatprep.subr.mxu0 0.0
    %97 = vmatpush1.msra.mxu0 0.0
    %98 = vmatprep.subr.mxu0 0.0
    %99 = vmatpush1.msra.mxu0 0.0
    %100 = vmatprep.subr.mxu0 0.0
    %101 = vmatpush1.msra.mxu0 0.0
    %102 = vmatprep.subr.mxu0 0.0
    %103 = vmatpush1.msra.mxu0 0.0
    %104 = vmatprep.subr.mxu0 0.0
    %105 = vmatpush1.msra.mxu0 0.0
    %106 = vmatprep.subr.mxu0 0.0
    %107 = vmatpush1.msra.mxu0 0.0
    %108 = vmatprep.subr.mxu0 0.0
    %109 = vmatpush1.msra.mxu0 0.0
    %110 = vmatprep.subr.mxu0 0.0
    %111 = vmatpush1.msra.mxu0 0.0
    %112 = vmatprep.subr.mxu0 0.0
    %113 = vmatpush1.msra.mxu0 0.0
    %114 = vmatprep.subr.mxu0 0.0
    %115 = vmatpush1.msra.mxu0 0.0
    %116 = vmatprep.subr.mxu0 0.0
    %117 = vmatpush1.msra.mxu0 0.0
    %118 = vmatprep.subr.mxu0 0.0
    %119 = vmatpush1.msra.mxu0 0.0
    %120 = vmatprep.subr.mxu0 0.0
    %121 = vmatpush1.msra.mxu0 0.0
    %122 = vmatprep.subr.mxu0 0.0
    %123 = vmatpush1.msra.mxu0 0.0
    %124 = vmatprep.subr.mxu0 0.0
    %125 = vmatpush1.msra.mxu0 0.0
    %126 = vmatprep.subr.mxu0 0.0
    %127 = vmatpush1.msra.mxu0 0.0
    %128 = vmatprep.subr.mxu0 0.0
    %129 = vmatpush1.msra.mxu0 0.0
    %130 = vmatprep.mubr.f32.mxu0 0.0
    %131 = vmatmul.mubr.f32.gmra.mrb[0].mxu0 %v61
    %v132 = vpop.f32.mrb[0].mxu0
    %v133 = vadd.f32 %v58, %v132
    %v134 = vpop.f32.mrb[0].mxu0
    %135 = vmatprep.mubr.f32.mxu0 0.0
    %136 = vmatmul.mubr.f32.gmra.mrb[0].mxu0 %v64
    %v137 = vpop.f32.mrb[0].mxu0
    %v138 = vadd.f32 %v58, %v137
    %v139 = vpop.f32.mrb[0].mxu0
    %140 = vdwg.mxu0
    %142 = vrot.lane.b32.xlu0 %v133, 96
    %v143 = vpop.permute.xlu0 %142
    %vm144 = vcmask 64512
    %v145 = vsel %vm144, %v133, 0
    %v147 = vsel %vm144, %v143, 0
    %149 = vmatprep.subr.mxu0 0.0
    %150 = vmatpush1.xpose.msra.mxu0 %v147
    %151 = vmatprep.subr.mxu0 0.0
    %152 = vmatpush1.xpose.msra.mxu0 0.0
    %153 = vmatprep.subr.mxu0 0.0
    %154 = vmatpush1.xpose.msra.mxu0 0.0
    %155 = vmatprep.subr.mxu0 0.0
    %156 = vmatpush1.xpose.msra.mxu0 0.0
    %157 = vmatprep.subr.mxu0 0.0
    %158 = vmatpush1.xpose.msra.mxu0 0.0
    %159 = vmatprep.subr.mxu0 0.0
    %160 = vmatpush1.xpose.msra.mxu0 0.0
    %161 = vmatprep.subr.mxu0 0.0
    %162 = vmatpush1.xpose.msra.mxu0 0.0
    %163 = vmatprep.subr.mxu0 0.0
    %164 = vmatpush1.xpose.msra.mxu0 0.0
    %165 = vmatprep.subr.mxu0 0.0
    %166 = vmatpush1.xpose.msra.mxu0 0.0
    %167 = vmatprep.subr.mxu0 0.0
    %168 = vmatpush1.xpose.msra.mxu0 0.0
    %169 = vmatprep.subr.mxu0 0.0
    %170 = vmatpush1.xpose.msra.mxu0 0.0
    %171 = vmatprep.subr.mxu0 0.0
    %172 = vmatpush1.xpose.msra.mxu0 0.0
    %173 = vmatprep.subr.mxu0 0.0
    %174 = vmatpush1.xpose.msra.mxu0 0.0
    %175 = vmatprep.subr.mxu0 0.0
    %176 = vmatpush1.xpose.msra.mxu0 0.0
    %177 = vmatprep.subr.mxu0 0.0
    %178 = vmatpush1.xpose.msra.mxu0 0.0
    %179 = vmatprep.subr.mxu0 0.0
    %180 = vmatpush1.xpose.msra.mxu0 0.0
    %181 = vmatprep.subr.mxu0 0.0
    %182 = vmatpush1.xpose.msra.mxu0 0.0
    %183 = vmatprep.subr.mxu0 0.0
    %184 = vmatpush1.xpose.msra.mxu0 0.0
    %185 = vmatprep.subr.mxu0 0.0
    %186 = vmatpush1.xpose.msra.mxu0 0.0
    %187 = vmatprep.subr.mxu0 0.0
    %188 = vmatpush1.xpose.msra.mxu0 0.0
    %189 = vmatprep.subr.mxu0 0.0
    %190 = vmatpush1.xpose.msra.mxu0 0.0
    %191 = vmatprep.subr.mxu0 0.0
    %192 = vmatpush1.xpose.msra.mxu0 0.0
    %193 = vmatprep.subr.mxu0 0.0
    %194 = vmatpush1.xpose.msra.mxu0 0.0
    %195 = vmatprep.subr.mxu0 0.0
    %196 = vmatpush1.xpose.msra.mxu0 0.0
    %197 = vmatprep.subr.mxu0 0.0
    %198 = vmatpush1.xpose.msra.mxu0 0.0
    %199 = vmatprep.subr.mxu0 0.0
    %200 = vmatpush1.xpose.msra.mxu0 0.0
    %201 = vmatprep.subr.mxu0 0.0
    %202 = vmatpush1.xpose.msra.mxu0 0.0
    %203 = vmatprep.subr.mxu0 0.0
    %204 = vmatpush1.xpose.msra.mxu0 0.0
    %205 = vmatprep.subr.mxu0 0.0
    %206 = vmatpush1.xpose.msra.mxu0 0.0
    %207 = vmatprep.subr.mxu0 0.0
    %208 = vmatpush1.xpose.msra.mxu0 0.0
    %209 = vmatprep.subr.mxu0 0.0
    %210 = vmatpush1.xpose.msra.mxu0 0.0
    %211 = vmatprep.subr.mxu0 0.0
    %212 = vmatpush1.xpose.msra.mxu0 0.0
    %213 = vmatprep.mubr.f32.mxu0 0.0
    %214 = vmatmul.mubr.f32.gmra.mrb[0].mxu0 %v145
    %v215 = vpop.f32.mrb[0].mxu0
    %v216 = vadd.f32 0.0, %v215
    %v217 = vpop.f32.mrb[0].mxu0
    %218 = vdwg.mxu0
    %v219 = vsel %vm144, %v216, -inf
    %220 = vmax.xlane.f32.xlu0 %v219
    %v221 = vpop.xlane.xlu0 %220
    %v222 = vsub.f32 %v216, %v221
    %v223 = vmul.f32 %v222, 1.442695
    %v224 = vpow.pop %v223
    %v225 = vsel %vm144, %v224, 0.0
    %226 = vadd.xlane.f32.xlu0 %v225
    %v227 = vpop.xlane.xlu0 %226
    %v228 = vrcp.pop %v227
    %v229 = vmul.f32 %v224, %v228
    %230 = vst.msk [vmem:[#allocation7] sm:$0xff] %vm144, %v229
    %231 = vrot.lane.b32.xlu0 %v133, 64
    %v232 = vpop.permute.xlu0 %231
    %v235 = vsel %vm144, %v229, 0
    %237 = vmatprep.subr.mxu0 0.0
    %238 = vmatpush1.msra.mxu0 %v232
    %239 = vmatprep.subr.mxu0 0.0
    %240 = vmatpush1.msra.mxu0 0.0
    %241 = vmatprep.subr.mxu0 0.0
    %242 = vmatpush1.msra.mxu0 0.0
    %243 = vmatprep.subr.mxu0 0.0
    %244 = vmatpush1.msra.mxu0 0.0
    %245 = vmatprep.subr.mxu0 0.0
    %246 = vmatpush1.msra.mxu0 0.0
    %247 = vmatprep.subr.mxu0 0.0
    %248 = vmatpush1.msra.mxu0 0.0
    %249 = vmatprep.subr.mxu0 0.0
    %250 = vmatpush1.msra.mxu0 0.0
    %251 = vmatprep.subr.mxu0 0.0
    %252 = vmatpush1.msra.mxu0 0.0
    %253 = vmatprep.subr.mxu0 0.0
    %254 = vmatpush1.msra.mxu0 0.0
    %255 = vmatprep.subr.mxu0 0.0
    %256 = vmatpush1.msra.mxu0 0.0
    %257 = vmatprep.subr.mxu0 0.0
    %258 = vmatpush1.msra.mxu0 0.0
    %259 = vmatprep.subr.mxu0 0.0
    %260 = vmatpush1.msra.mxu0 0.0
    %261 = vmatprep.subr.mxu0 0.0
    %262 = vmatpush1.msra.mxu0 0.0
    %263 = vmatprep.subr.mxu0 0.0
    %264 = vmatpush1.msra.mxu0 0.0
    %265 = vmatprep.subr.mxu0 0.0
    %266 = vmatpush1.msra.mxu0 0.0
    %267 = vmatprep.subr.mxu0 0.0
    %268 = vmatpush1.msra.mxu0 0.0
    %269 = vmatprep.subr.mxu0 0.0
    %270 = vmatpush1.msra.mxu0 0.0
    %271 = vmatprep.subr.mxu0 0.0
    %272 = vmatpush1.msra.mxu0 0.0
    %273 = vmatprep.subr.mxu0 0.0
    %274 = vmatpush1.msra.mxu0 0.0
    %275 = vmatprep.subr.mxu0 0.0
    %276 = vmatpush1.msra.mxu0 0.0
    %277 = vmatprep.subr.mxu0 0.0
    %278 = vmatpush1.msra.mxu0 0.0
    %279 = vmatprep.subr.mxu0 0.0
    %280 = vmatpush1.msra.mxu0 0.0
    %281 = vmatprep.subr.mxu0 0.0
    %282 = vmatpush1.msra.mxu0 0.0
    %283 = vmatprep.subr.mxu0 0.0
    %284 = vmatpush1.msra.mxu0 0.0
    %285 = vmatprep.subr.mxu0 0.0
    %286 = vmatpush1.msra.mxu0 0.0
    %287 = vmatprep.subr.mxu0 0.0
    %288 = vmatpush1.msra.mxu0 0.0
    %289 = vmatprep.subr.mxu0 0.0
    %290 = vmatpush1.msra.mxu0 0.0
    %291 = vmatprep.subr.mxu0 0.0
    %292 = vmatpush1.msra.mxu0 0.0
    %293 = vmatprep.subr.mxu0 0.0
    %294 = vmatpush1.msra.mxu0 0.0
    %295 = vmatprep.subr.mxu0 0.0
    %296 = vmatpush1.msra.mxu0 0.0
    %297 = vmatprep.subr.mxu0 0.0
    %298 = vmatpush1.msra.mxu0 0.0
    %299 = vmatprep.subr.mxu0 0.0
    %300 = vmatpush1.msra.mxu0 0.0
    %301 = vmatprep.mubr.f32.mxu0 0.0
    %302 = vmatmul.mubr.f32.gmra.mrb[0].mxu0 %v235
    %v303 = vpop.f32.mrb[0].mxu0
    %v304 = vadd.f32 0.0, %v303
    %v305 = vpop.f32.mrb[0].mxu0
    %306 = vdwg.mxu0
    %307 = vst.msk [vmem:[#allocation2] sm:$0xff] %vm144, %v304
    %308 = vrot.lane.b32.xlu0 %v133, 120
    %v309 = vpop.permute.xlu0 %308
    %310 = vrot.lane.b32.xlu0 %v133, 88
    %v311 = vpop.permute.xlu0 %310
    %v312 = vsel %vm144, %v309, 0
    %v314 = vsel %vm144, %v311, 0
    %316 = vmatprep.subr.mxu0 0.0
    %317 = vmatpush1.xpose.msra.mxu0 %v314
    %318 = vmatprep.subr.mxu0 0.0
    %319 = vmatpush1.xpose.msra.mxu0 0.0
    %320 = vmatprep.subr.mxu0 0.0
    %321 = vmatpush1.xpose.msra.mxu0 0.0
    %322 = vmatprep.subr.mxu0 0.0
    %323 = vmatpush1.xpose.msra.mxu0 0.0
    %324 = vmatprep.subr.mxu0 0.0
    %325 = vmatpush1.xpose.msra.mxu0 0.0
    %326 = vmatprep.subr.mxu0 0.0
    %327 = vmatpush1.xpose.msra.mxu0 0.0
    %328 = vmatprep.subr.mxu0 0.0
    %329 = vmatpush1.xpose.msra.mxu0 0.0
    %330 = vmatprep.subr.mxu0 0.0
    %331 = vmatpush1.xpose.msra.mxu0 0.0
    %332 = vmatprep.subr.mxu0 0.0
    %333 = vmatpush1.xpose.msra.mxu0 0.0
    %334 = vmatprep.subr.mxu0 0.0
    %335 = vmatpush1.xpose.msra.mxu0 0.0
    %336 = vmatprep.subr.mxu0 0.0
    %337 = vmatpush1.xpose.msra.mxu0 0.0
    %338 = vmatprep.subr.mxu0 0.0
    %339 = vmatpush1.xpose.msra.mxu0 0.0
    %340 = vmatprep.subr.mxu0 0.0
    %341 = vmatpush1.xpose.msra.mxu0 0.0
    %342 = vmatprep.subr.mxu0 0.0
    %343 = vmatpush1.xpose.msra.mxu0 0.0
    %344 = vmatprep.subr.mxu0 0.0
    %345 = vmatpush1.xpose.msra.mxu0 0.0
    %346 = vmatprep.subr.mxu0 0.0
    %347 = vmatpush1.xpose.msra.mxu0 0.0
    %348 = vmatprep.subr.mxu0 0.0
    %349 = vmatpush1.xpose.msra.mxu0 0.0
    %350 = vmatprep.subr.mxu0 0.0
    %351 = vmatpush1.xpose.msra.mxu0 0.0
    %352 = vmatprep.subr.mxu0 0.0
    %353 = vmatpush1.xpose.msra.mxu0 0.0
    %354 = vmatprep.subr.mxu0 0.0
    %355 = vmatpush1.xpose.msra.mxu0 0.0
    %356 = vmatprep.subr.mxu0 0.0
    %357 = vmatpush1.xpose.msra.mxu0 0.0
    %358 = vmatprep.subr.mxu0 0.0
    %359 = vmatpush1.xpose.msra.mxu0 0.0
    %360 = vmatprep.subr.mxu0 0.0
    %361 = vmatpush1.xpose.msra.mxu0 0.0
    %362 = vmatprep.subr.mxu0 0.0
    %363 = vmatpush1.xpose.msra.mxu0 0.0
    %364 = vmatprep.subr.mxu0 0.0
    %365 = vmatpush1.xpose.msra.mxu0 0.0
    %366 = vmatprep.subr.mxu0 0.0
    %367 = vmatpush1.xpose.msra.mxu0 0.0
    %368 = vmatprep.subr.mxu0 0.0
    %369 = vmatpush1.xpose.msra.mxu0 0.0
    %370 = vmatprep.subr.mxu0 0.0
    %371 = vmatpush1.xpose.msra.mxu0 0.0
    %372 = vmatprep.subr.mxu0 0.0
    %373 = vmatpush1.xpose.msra.mxu0 0.0
    %374 = vmatprep.subr.mxu0 0.0
    %375 = vmatpush1.xpose.msra.mxu0 0.0
    %376 = vmatprep.subr.mxu0 0.0
    %377 = vmatpush1.xpose.msra.mxu0 0.0
    %378 = vmatprep.subr.mxu0 0.0
    %379 = vmatpush1.xpose.msra.mxu0 0.0
    %380 = vmatprep.mubr.f32.mxu0 0.0
    %381 = vmatmul.mubr.f32.gmra.mrb[0].mxu0 %v312
    %v382 = vpop.f32.mrb[0].mxu0
    %v383 = vadd.f32 0.0, %v382
    %v384 = vpop.f32.mrb[0].mxu0
    %385 = vdwg.mxu0
    %v386 = vsel %vm144, %v383, -inf
    %387 = vmax.xlane.f32.xlu0 %v386
    %v388 = vpop.xlane.xlu0 %387
    %v389 = vsub.f32 %v383, %v388
    %v390 = vmul.f32 %v389, 1.442695
    %v391 = vpow.pop %v390
    %v392 = vsel %vm144, %v391, 0.0
    %393 = vadd.xlane.f32.xlu0 %v392
    %v394 = vpop.xlane.xlu0 %393
    %v395 = vrcp.pop %v394
    %v396 = vmul.f32 %v391, %v395
    %398 = vrot.lane.b32.xlu0 %v396, 8
    %v399 = vpop.permute.xlu0 %398
    %vm401 = vcmask 130112
    %402 = vst.msk [vmem:[#allocation7] sm:$0xff] %vm401, %v399
    %403 = vrot.lane.b32.xlu0 %v133, 56
    %v404 = vpop.permute.xlu0 %403
    %v406 = vsel %vm144, %v396, 0
    %408 = vmatprep.subr.mxu0 0.0
    %409 = vmatpush1.msra.mxu0 %v404
    %410 = vmatprep.subr.mxu0 0.0
    %411 = vmatpush1.msra.mxu0 0.0
    %412 = vmatprep.subr.mxu0 0.0
    %413 = vmatpush1.msra.mxu0 0.0
    %414 = vmatprep.subr.mxu0 0.0
    %415 = vmatpush1.msra.mxu0 0.0
    %416 = vmatprep.subr.mxu0 0.0
    %417 = vmatpush1.msra.mxu0 0.0
    %418 = vmatprep.subr.mxu0 0.0
    %419 = vmatpush1.msra.mxu0 0.0
    %420 = vmatprep.subr.mxu0 0.0
    %421 = vmatpush1.msra.mxu0 0.0
    %422 = vmatprep.subr.mxu0 0.0
    %423 = vmatpush1.msra.mxu0 0.0
    %424 = vmatprep.subr.mxu0 0.0
    %425 = vmatpush1.msra.mxu0 0.0
    %426 = vmatprep.subr.mxu0 0.0
    %427 = vmatpush1.msra.mxu0 0.0
    %428 = vmatprep.subr.mxu0 0.0
    %429 = vmatpush1.msra.mxu0 0.0
    %430 = vmatprep.subr.mxu0 0.0
    %431 = vmatpush1.msra.mxu0 0.0
    %432 = vmatprep.subr.mxu0 0.0
    %433 = vmatpush1.msra.mxu0 0.0
    %434 = vmatprep.subr.mxu0 0.0
    %435 = vmatpush1.msra.mxu0 0.0
    %436 = vmatprep.subr.mxu0 0.0
    %437 = vmatpush1.msra.mxu0 0.0
    %438 = vmatprep.subr.mxu0 0.0
    %439 = vmatpush1.msra.mxu0 0.0
    %440 = vmatprep.subr.mxu0 0.0
    %441 = vmatpush1.msra.mxu0 0.0
    %442 = vmatprep.subr.mxu0 0.0
    %443 = vmatpush1.msra.mxu0 0.0
    %444 = vmatprep.subr.mxu0 0.0
    %445 = vmatpush1.msra.mxu0 0.0
    %446 = vmatprep.subr.mxu0 0.0
    %447 = vmatpush1.msra.mxu0 0.0
    %448 = vmatprep.subr.mxu0 0.0
    %449 = vmatpush1.msra.mxu0 0.0
    %450 = vmatprep.subr.mxu0 0.0
    %451 = vmatpush1.msra.mxu0 0.0
    %452 = vmatprep.subr.mxu0 0.0
    %453 = vmatpush1.msra.mxu0 0.0
    %454 = vmatprep.subr.mxu0 0.0
    %455 = vmatpush1.msra.mxu0 0.0
    %456 = vmatprep.subr.mxu0 0.0
    %457 = vmatpush1.msra.mxu0 0.0
    %458 = vmatprep.subr.mxu0 0.0
    %459 = vmatpush1.msra.mxu0 0.0
    %460 = vmatprep.subr.mxu0 0.0
    %461 = vmatpush1.msra.mxu0 0.0
    %462 = vmatprep.subr.mxu0 0.0
    %463 = vmatpush1.msra.mxu0 0.0
    %464 = vmatprep.subr.mxu0 0.0
    %465 = vmatpush1.msra.mxu0 0.0
    %466 = vmatprep.subr.mxu0 0.0
    %467 = vmatpush1.msra.mxu0 0.0
    %468 = vmatprep.subr.mxu0 0.0
    %469 = vmatpush1.msra.mxu0 0.0
    %470 = vmatprep.subr.mxu0 0.0
    %471 = vmatpush1.msra.mxu0 0.0
    %472 = vmatprep.mubr.f32.mxu0 0.0
    %473 = vmatmul.mubr.f32.gmra.mrb[0].mxu0 %v406
    %v474 = vpop.f32.mrb[0].mxu0
    %v475 = vadd.f32 0.0, %v474
    %v476 = vpop.f32.mrb[0].mxu0
    %477 = vdwg.mxu0
    %479 = vrot.lane.b32.xlu0 %v475, 8
    %v480 = vpop.permute.xlu0 %479
    %482 = vst.msk [vmem:[#allocation2] sm:$0xff] %vm401, %v480
    %483 = vrot.lane.b32.xlu0 %v133, 112
    %v484 = vpop.permute.xlu0 %483
    %485 = vrot.lane.b32.xlu0 %v133, 80
    %v486 = vpop.permute.xlu0 %485
    %v487 = vsel %vm144, %v484, 0
    %v489 = vsel %vm144, %v486, 0
    %491 = vmatprep.subr.mxu0 0.0
    %492 = vmatpush1.xpose.msra.mxu0 %v489
    %493 = vmatprep.subr.mxu0 0.0
    %494 = vmatpush1.xpose.msra.mxu0 0.0
    %495 = vmatprep.subr.mxu0 0.0
    %496 = vmatpush1.xpose.msra.mxu0 0.0
    %497 = vmatprep.subr.mxu0 0.0
    %498 = vmatpush1.xpose.msra.mxu0 0.0
    %499 = vmatprep.subr.mxu0 0.0
    %500 = vmatpush1.xpose.msra.mxu0 0.0
    %501 = vmatprep.subr.mxu0 0.0
    %502 = vmatpush1.xpose.msra.mxu0 0.0
    %503 = vmatprep.subr.mxu0 0.0
    %504 = vmatpush1.xpose.msra.mxu0 0.0
    %505 = vmatprep.subr.mxu0 0.0
    %506 = vmatpush1.xpose.msra.mxu0 0.0
    %507 = vmatprep.subr.mxu0 0.0
    %508 = vmatpush1.xpose.msra.mxu0 0.0
    %509 = vmatprep.subr.mxu0 0.0
    %510 = vmatpush1.xpose.msra.mxu0 0.0
    %511 = vmatprep.subr.mxu0 0.0
    %512 = vmatpush1.xpose.msra.mxu0 0.0
    %513 = vmatprep.subr.mxu0 0.0
    %514 = vmatpush1.xpose.msra.mxu0 0.0
    %515 = vmatprep.subr.mxu0 0.0
    %516 = vmatpush1.xpose.msra.mxu0 0.0
    %517 = vmatprep.subr.mxu0 0.0
    %518 = vmatpush1.xpose.msra.mxu0 0.0
    %519 = vmatprep.subr.mxu0 0.0
    %520 = vmatpush1.xpose.msra.mxu0 0.0
    %521 = vmatprep.subr.mxu0 0.0
    %522 = vmatpush1.xpose.msra.mxu0 0.0
    %523 = vmatprep.subr.mxu0 0.0
    %524 = vmatpush1.xpose.msra.mxu0 0.0
    %525 = vmatprep.subr.mxu0 0.0
    %526 = vmatpush1.xpose.msra.mxu0 0.0
    %527 = vmatprep.subr.mxu0 0.0
    %528 = vmatpush1.xpose.msra.mxu0 0.0
    %529 = vmatprep.subr.mxu0 0.0
    %530 = vmatpush1.xpose.msra.mxu0 0.0
    %531 = vmatprep.subr.mxu0 0.0
    %532 = vmatpush1.xpose.msra.mxu0 0.0
    %533 = vmatprep.subr.mxu0 0.0
    %534 = vmatpush1.xpose.msra.mxu0 0.0
    %535 = vmatprep.subr.mxu0 0.0
    %536 = vmatpush1.xpose.msra.mxu0 0.0
    %537 = vmatprep.subr.mxu0 0.0
    %538 = vmatpush1.xpose.msra.mxu0 0.0
    %539 = vmatprep.subr.mxu0 0.0
    %540 = vmatpush1.xpose.msra.mxu0 0.0
    %541 = vmatprep.subr.mxu0 0.0
    %542 = vmatpush1.xpose.msra.mxu0 0.0
    %543 = vmatprep.subr.mxu0 0.0
    %544 = vmatpush1.xpose.msra.mxu0 0.0
    %545 = vmatprep.subr.mxu0 0.0
    %546 = vmatpush1.xpose.msra.mxu0 0.0
    %547 = vmatprep.subr.mxu0 0.0
    %548 = vmatpush1.xpose.msra.mxu0 0.0
    %549 = vmatprep.subr.mxu0 0.0
    %550 = vmatpush1.xpose.msra.mxu0 0.0
    %551 = vmatprep.subr.mxu0 0.0
    %552 = vmatpush1.xpose.msra.mxu0 0.0
    %553 = vmatprep.subr.mxu0 0.0
    %554 = vmatpush1.xpose.msra.mxu0 0.0
    %555 = vmatprep.mubr.f32.mxu0 0.0
    %556 = vmatmul.mubr.f32.gmra.mrb[0].mxu0 %v487
    %v557 = vpop.f32.mrb[0].mxu0
    %v558 = vadd.f32 0.0, %v557
    %v559 = vpop.f32.mrb[0].mxu0
    %560 = vdwg.mxu0
    %v561 = vsel %vm144, %v558, -inf
    %562 = vmax.xlane.f32.xlu0 %v561
    %v563 = vpop.xlane.xlu0 %562
    %v564 = vsub.f32 %v558, %v563
    %v565 = vmul.f32 %v564, 1.442695
    %v566 = vpow.pop %v565
    %v567 = vsel %vm144, %v566, 0.0
    %568 = vadd.xlane.f32.xlu0 %v567
    %v569 = vpop.xlane.xlu0 %568
    %v570 = vrcp.pop %v569
    %v571 = vmul.f32 %v566, %v570
    %573 = vrot.lane.b32.xlu0 %v571, 16
    %v574 = vpop.permute.xlu0 %573
    %vm576 = vcmask 195712
    %577 = vst.msk [vmem:[#allocation7] sm:$0xff] %vm576, %v574
    %578 = vrot.lane.b32.xlu0 %v133, 48
    %v579 = vpop.permute.xlu0 %578
    %v581 = vsel %vm144, %v571, 0
    %583 = vmatprep.subr.mxu0 0.0
    %584 = vmatpush1.msra.mxu0 %v579
    %585 = vmatprep.subr.mxu0 0.0
    %586 = vmatpush1.msra.mxu0 0.0
    %587 = vmatprep.subr.mxu0 0.0
    %588 = vmatpush1.msra.mxu0 0.0
    %589 = vmatprep.subr.mxu0 0.0
    %590 = vmatpush1.msra.mxu0 0.0
    %591 = vmatprep.subr.mxu0 0.0
    %592 = vmatpush1.msra.mxu0 0.0
    %593 = vmatprep.subr.mxu0 0.0
    %594 = vmatpush1.msra.mxu0 0.0
    %595 = vmatprep.subr.mxu0 0.0
    %596 = vmatpush1.msra.mxu0 0.0
    %597 = vmatprep.subr.mxu0 0.0
    %598 = vmatpush1.msra.mxu0 0.0
    %599 = vmatprep.subr.mxu0 0.0
    %600 = vmatpush1.msra.mxu0 0.0
    %601 = vmatprep.subr.mxu0 0.0
    %602 = vmatpush1.msra.mxu0 0.0
    %603 = vmatprep.subr.mxu0 0.0
    %604 = vmatpush1.msra.mxu0 0.0
    %605 = vmatprep.subr.mxu0 0.0
    %606 = vmatpush1.msra.mxu0 0.0
    %607 = vmatprep.subr.mxu0 0.0
    %608 = vmatpush1.msra.mxu0 0.0
    %609 = vmatprep.subr.mxu0 0.0
    %610 = vmatpush1.msra.mxu0 0.0
    %611 = vmatprep.subr.mxu0 0.0
    %612 = vmatpush1.msra.mxu0 0.0
    %613 = vmatprep.subr.mxu0 0.0
    %614 = vmatpush1.msra.mxu0 0.0
    %615 = vmatprep.subr.mxu0 0.0
    %616 = vmatpush1.msra.mxu0 0.0
    %617 = vmatprep.subr.mxu0 0.0
    %618 = vmatpush1.msra.mxu0 0.0
    %619 = vmatprep.subr.mxu0 0.0
    %620 = vmatpush1.msra.mxu0 0.0
    %621 = vmatprep.subr.mxu0 0.0
    %622 = vmatpush1.msra.mxu0 0.0
    %623 = vmatprep.subr.mxu0 0.0
    %624 = vmatpush1.msra.mxu0 0.0
    %625 = vmatprep.subr.mxu0 0.0
    %626 = vmatpush1.msra.mxu0 0.0
    %627 = vmatprep.subr.mxu0 0.0
    %628 = vmatpush1.msra.mxu0 0.0
    %629 = vmatprep.subr.mxu0 0.0
    %630 = vmatpush1.msra.mxu0 0.0
    %631 = vmatprep.subr.mxu0 0.0
    %632 = vmatpush1.msra.mxu0 0.0
    %633 = vmatprep.subr.mxu0 0.0
    %634 = vmatpush1.msra.mxu0 0.0
    %635 = vmatprep.subr.mxu0 0.0
    %636 = vmatpush1.msra.mxu0 0.0
    %637 = vmatprep.subr.mxu0 0.0
    %638 = vmatpush1.msra.mxu0 0.0
    %639 = vmatprep.subr.mxu0 0.0
    %640 = vmatpush1.msra.mxu0 0.0
    %641 = vmatprep.subr.mxu0 0.0
    %642 = vmatpush1.msra.mxu0 0.0
    %643 = vmatprep.subr.mxu0 0.0
    %644 = vmatpush1.msra.mxu0 0.0
    %645 = vmatprep.subr.mxu0 0.0
    %646 = vmatpush1.msra.mxu0 0.0
    %647 = vmatprep.mubr.f32.mxu0 0.0
    %648 = vmatmul.mubr.f32.gmra.mrb[0].mxu0 %v581
    %v649 = vpop.f32.mrb[0].mxu0
    %v650 = vadd.f32 0.0, %v649
    %v651 = vpop.f32.mrb[0].mxu0
    %652 = vdwg.mxu0
    %654 = vrot.lane.b32.xlu0 %v650, 16
    %v655 = vpop.permute.xlu0 %654
    %657 = vst.msk [vmem:[#allocation2] sm:$0xff] %vm576, %v655
    %658 = vrot.lane.b32.xlu0 %v133, 104
    %v659 = vpop.permute.xlu0 %658
    %660 = vrot.lane.b32.xlu0 %v133, 72
    %v661 = vpop.permute.xlu0 %660
    %v662 = vsel %vm144, %v659, 0
    %v664 = vsel %vm144, %v661, 0
    %666 = vmatprep.subr.mxu0 0.0
    %667 = vmatpush1.xpose.msra.mxu0 %v664
    %668 = vmatprep.subr.mxu0 0.0
    %669 = vmatpush1.xpose.msra.mxu0 0.0
    %670 = vmatprep.subr.mxu0 0.0
    %671 = vmatpush1.xpose.msra.mxu0 0.0
    %672 = vmatprep.subr.mxu0 0.0
    %673 = vmatpush1.xpose.msra.mxu0 0.0
    %674 = vmatprep.subr.mxu0 0.0
    %675 = vmatpush1.xpose.msra.mxu0 0.0
    %676 = vmatprep.subr.mxu0 0.0
    %677 = vmatpush1.xpose.msra.mxu0 0.0
    %678 = vmatprep.subr.mxu0 0.0
    %679 = vmatpush1.xpose.msra.mxu0 0.0
    %680 = vmatprep.subr.mxu0 0.0
    %681 = vmatpush1.xpose.msra.mxu0 0.0
    %682 = vmatprep.subr.mxu0 0.0
    %683 = vmatpush1.xpose.msra.mxu0 0.0
    %684 = vmatprep.subr.mxu0 0.0
    %685 = vmatpush1.xpose.msra.mxu0 0.0
    %686 = vmatprep.subr.mxu0 0.0
    %687 = vmatpush1.xpose.msra.mxu0 0.0
    %688 = vmatprep.subr.mxu0 0.0
    %689 = vmatpush1.xpose.msra.mxu0 0.0
    %690 = vmatprep.subr.mxu0 0.0
    %691 = vmatpush1.xpose.msra.mxu0 0.0
    %692 = vmatprep.subr.mxu0 0.0
    %693 = vmatpush1.xpose.msra.mxu0 0.0
    %694 = vmatprep.subr.mxu0 0.0
    %695 = vmatpush1.xpose.msra.mxu0 0.0
    %696 = vmatprep.subr.mxu0 0.0
    %697 = vmatpush1.xpose.msra.mxu0 0.0
    %698 = vmatprep.subr.mxu0 0.0
    %699 = vmatpush1.xpose.msra.mxu0 0.0
    %700 = vmatprep.subr.mxu0 0.0
    %701 = vmatpush1.xpose.msra.mxu0 0.0
    %702 = vmatprep.subr.mxu0 0.0
    %703 = vmatpush1.xpose.msra.mxu0 0.0
    %704 = vmatprep.subr.mxu0 0.0
    %705 = vmatpush1.xpose.msra.mxu0 0.0
    %706 = vmatprep.subr.mxu0 0.0
    %707 = vmatpush1.xpose.msra.mxu0 0.0
    %708 = vmatprep.subr.mxu0 0.0
    %709 = vmatpush1.xpose.msra.mxu0 0.0
    %710 = vmatprep.subr.mxu0 0.0
    %711 = vmatpush1.xpose.msra.mxu0 0.0
    %712 = vmatprep.subr.mxu0 0.0
    %713 = vmatpush1.xpose.msra.mxu0 0.0
    %714 = vmatprep.subr.mxu0 0.0
    %715 = vmatpush1.xpose.msra.mxu0 0.0
    %716 = vmatprep.subr.mxu0 0.0
    %717 = vmatpush1.xpose.msra.mxu0 0.0
    %718 = vmatprep.subr.mxu0 0.0
    %719 = vmatpush1.xpose.msra.mxu0 0.0
    %720 = vmatprep.subr.mxu0 0.0
    %721 = vmatpush1.xpose.msra.mxu0 0.0
    %722 = vmatprep.subr.mxu0 0.0
    %723 = vmatpush1.xpose.msra.mxu0 0.0
    %724 = vmatprep.subr.mxu0 0.0
    %725 = vmatpush1.xpose.msra.mxu0 0.0
    %726 = vmatprep.subr.mxu0 0.0
    %727 = vmatpush1.xpose.msra.mxu0 0.0
    %728 = vmatprep.subr.mxu0 0.0
    %729 = vmatpush1.xpose.msra.mxu0 0.0
    %730 = vmatprep.mubr.f32.mxu0 0.0
    %731 = vmatmul.mubr.f32.gmra.mrb[0].mxu0 %v662
    %v732 = vpop.f32.mrb[0].mxu0
    %v733 = vadd.f32 0.0, %v732
    %v734 = vpop.f32.mrb[0].mxu0
    %735 = vdwg.mxu0
    %v736 = vsel %vm144, %v733, -inf
    %737 = vmax.xlane.f32.xlu0 %v736
    %v738 = vpop.xlane.xlu0 %737
    %v739 = vsub.f32 %v733, %v738
    %v740 = vmul.f32 %v739, 1.442695
    %v741 = vpow.pop %v740
    %v742 = vsel %vm144, %v741, 0.0
    %743 = vadd.xlane.f32.xlu0 %v742
    %v744 = vpop.xlane.xlu0 %743
    %v745 = vrcp.pop %v744
    %v746 = vmul.f32 %v741, %v745
    %748 = vrot.lane.b32.xlu0 %v746, 24
    %v749 = vpop.permute.xlu0 %748
    %vm751 = vcmask 261312
    %752 = vst.msk [vmem:[#allocation7] sm:$0xff] %vm751, %v749
    %753 = vrot.lane.b32.xlu0 %v133, 40
    %v754 = vpop.permute.xlu0 %753
    %v756 = vsel %vm144, %v746, 0
    %758 = vmatprep.subr.mxu0 0.0
    %759 = vmatpush1.msra.mxu0 %v754
    %760 = vmatprep.subr.mxu0 0.0
    %761 = vmatpush1.msra.mxu0 0.0
    %762 = vmatprep.subr.mxu0 0.0
    %763 = vmatpush1.msra.mxu0 0.0
    %764 = vmatprep.subr.mxu0 0.0
    %765 = vmatpush1.msra.mxu0 0.0
    %766 = vmatprep.subr.mxu0 0.0
    %767 = vmatpush1.msra.mxu0 0.0
    %768 = vmatprep.subr.mxu0 0.0
    %769 = vmatpush1.msra.mxu0 0.0
    %770 = vmatprep.subr.mxu0 0.0
    %771 = vmatpush1.msra.mxu0 0.0
    %772 = vmatprep.subr.mxu0 0.0
    %773 = vmatpush1.msra.mxu0 0.0
    %774 = vmatprep.subr.mxu0 0.0
    %775 = vmatpush1.msra.mxu0 0.0
    %776 = vmatprep.subr.mxu0 0.0
    %777 = vmatpush1.msra.mxu0 0.0
    %778 = vmatprep.subr.mxu0 0.0
    %779 = vmatpush1.msra.mxu0 0.0
    %780 = vmatprep.subr.mxu0 0.0
    %781 = vmatpush1.msra.mxu0 0.0
    %782 = vmatprep.subr.mxu0 0.0
    %783 = vmatpush1.msra.mxu0 0.0
    %784 = vmatprep.subr.mxu0 0.0
    %785 = vmatpush1.msra.mxu0 0.0
    %786 = vmatprep.subr.mxu0 0.0
    %787 = vmatpush1.msra.mxu0 0.0
    %788 = vmatprep.subr.mxu0 0.0
    %789 = vmatpush1.msra.mxu0 0.0
    %790 = vmatprep.subr.mxu0 0.0
    %791 = vmatpush1.msra.mxu0 0.0
    %792 = vmatprep.subr.mxu0 0.0
    %793 = vmatpush1.msra.mxu0 0.0
    %794 = vmatprep.subr.mxu0 0.0
    %795 = vmatpush1.msra.mxu0 0.0
    %796 = vmatprep.subr.mxu0 0.0
    %797 = vmatpush1.msra.mxu0 0.0
    %798 = vmatprep.subr.mxu0 0.0
    %799 = vmatpush1.msra.mxu0 0.0
    %800 = vmatprep.subr.mxu0 0.0
    %801 = vmatpush1.msra.mxu0 0.0
    %802 = vmatprep.subr.mxu0 0.0
    %803 = vmatpush1.msra.mxu0 0.0
    %804 = vmatprep.subr.mxu0 0.0
    %805 = vmatpush1.msra.mxu0 0.0
    %806 = vmatprep.subr.mxu0 0.0
    %807 = vmatpush1.msra.mxu0 0.0
    %808 = vmatprep.subr.mxu0 0.0
    %809 = vmatpush1.msra.mxu0 0.0
    %810 = vmatprep.subr.mxu0 0.0
    %811 = vmatpush1.msra.mxu0 0.0
    %812 = vmatprep.subr.mxu0 0.0
    %813 = vmatpush1.msra.mxu0 0.0
    %814 = vmatprep.subr.mxu0 0.0
    %815 = vmatpush1.msra.mxu0 0.0
    %816 = vmatprep.subr.mxu0 0.0
    %817 = vmatpush1.msra.mxu0 0.0
    %818 = vmatprep.subr.mxu0 0.0
    %819 = vmatpush1.msra.mxu0 0.0
    %820 = vmatprep.subr.mxu0 0.0
    %821 = vmatpush1.msra.mxu0 0.0
    %822 = vmatprep.mubr.f32.mxu0 0.0
    %823 = vmatmul.mubr.f32.gmra.mrb[0].mxu0 %v756
    %v824 = vpop.f32.mrb[0].mxu0
    %v825 = vadd.f32 0.0, %v824
    %v826 = vpop.f32.mrb[0].mxu0
    %827 = vdwg.mxu0
    %829 = vrot.lane.b32.xlu0 %v825, 24
    %v830 = vpop.permute.xlu0 %829
    %832 = vst.msk [vmem:[#allocation2] sm:$0xff] %vm751, %v830
    %834 = vrot.lane.b32.xlu0 %v138, 96
    %v835 = vpop.permute.xlu0 %834
    %v836 = vsel %vm144, %v138, 0
    %v838 = vsel %vm144, %v835, 0
    %840 = vmatprep.subr.mxu0 0.0
    %841 = vmatpush1.xpose.msra.mxu0 %v838
    %842 = vmatprep.subr.mxu0 0.0
    %843 = vmatpush1.xpose.msra.mxu0 0.0
    %844 = vmatprep.subr.mxu0 0.0
    %845 = vmatpush1.xpose.msra.mxu0 0.0
    %846 = vmatprep.subr.mxu0 0.0
    %847 = vmatpush1.xpose.msra.mxu0 0.0
    %848 = vmatprep.subr.mxu0 0.0
    %849 = vmatpush1.xpose.msra.mxu0 0.0
    %850 = vmatprep.subr.mxu0 0.0
    %851 = vmatpush1.xpose.msra.mxu0 0.0
    %852 = vmatprep.subr.mxu0 0.0
    %853 = vmatpush1.xpose.msra.mxu0 0.0
    %854 = vmatprep.subr.mxu0 0.0
    %855 = vmatpush1.xpose.msra.mxu0 0.0
    %856 = vmatprep.subr.mxu0 0.0
    %857 = vmatpush1.xpose.msra.mxu0 0.0
    %858 = vmatprep.subr.mxu0 0.0
    %859 = vmatpush1.xpose.msra.mxu0 0.0
    %860 = vmatprep.subr.mxu0 0.0
    %861 = vmatpush1.xpose.msra.mxu0 0.0
    %862 = vmatprep.subr.mxu0 0.0
    %863 = vmatpush1.xpose.msra.mxu0 0.0
    %864 = vmatprep.subr.mxu0 0.0
    %865 = vmatpush1.xpose.msra.mxu0 0.0
    %866 = vmatprep.subr.mxu0 0.0
    %867 = vmatpush1.xpose.msra.mxu0 0.0
    %868 = vmatprep.subr.mxu0 0.0
    %869 = vmatpush1.xpose.msra.mxu0 0.0
    %870 = vmatprep.subr.mxu0 0.0
    %871 = vmatpush1.xpose.msra.mxu0 0.0
    %872 = vmatprep.subr.mxu0 0.0
    %873 = vmatpush1.xpose.msra.mxu0 0.0
    %874 = vmatprep.subr.mxu0 0.0
    %875 = vmatpush1.xpose.msra.mxu0 0.0
    %876 = vmatprep.subr.mxu0 0.0
    %877 = vmatpush1.xpose.msra.mxu0 0.0
    %878 = vmatprep.subr.mxu0 0.0
    %879 = vmatpush1.xpose.msra.mxu0 0.0
    %880 = vmatprep.subr.mxu0 0.0
    %881 = vmatpush1.xpose.msra.mxu0 0.0
    %882 = vmatprep.subr.mxu0 0.0
    %883 = vmatpush1.xpose.msra.mxu0 0.0
    %884 = vmatprep.subr.mxu0 0.0
    %885 = vmatpush1.xpose.msra.mxu0 0.0
    %886 = vmatprep.subr.mxu0 0.0
    %887 = vmatpush1.xpose.msra.mxu0 0.0
    %888 = vmatprep.subr.mxu0 0.0
    %889 = vmatpush1.xpose.msra.mxu0 0.0
    %890 = vmatprep.subr.mxu0 0.0
    %891 = vmatpush1.xpose.msra.mxu0 0.0
    %892 = vmatprep.subr.mxu0 0.0
    %893 = vmatpush1.xpose.msra.mxu0 0.0
    %894 = vmatprep.subr.mxu0 0.0
    %895 = vmatpush1.xpose.msra.mxu0 0.0
    %896 = vmatprep.subr.mxu0 0.0
    %897 = vmatpush1.xpose.msra.mxu0 0.0
    %898 = vmatprep.subr.mxu0 0.0
    %899 = vmatpush1.xpose.msra.mxu0 0.0
    %900 = vmatprep.subr.mxu0 0.0
    %901 = vmatpush1.xpose.msra.mxu0 0.0
    %902 = vmatprep.subr.mxu0 0.0
    %903 = vmatpush1.xpose.msra.mxu0 0.0
    %904 = vmatprep.mubr.f32.mxu0 0.0
    %905 = vmatmul.mubr.f32.gmra.mrb[0].mxu0 %v836
    %v906 = vpop.f32.mrb[0].mxu0
    %v907 = vadd.f32 0.0, %v906
    %v908 = vpop.f32.mrb[0].mxu0
    %909 = vdwg.mxu0
    %v910 = vsel %vm144, %v907, -inf
    %911 = vmax.xlane.f32.xlu0 %v910
    %v912 = vpop.xlane.xlu0 %911
    %v913 = vsub.f32 %v907, %v912
    %v914 = vmul.f32 %v913, 1.442695
    %v915 = vpow.pop %v914
    %v916 = vsel %vm144, %v915, 0.0
    %917 = vadd.xlane.f32.xlu0 %v916
    %v918 = vpop.xlane.xlu0 %917
    %v919 = vrcp.pop %v918
    %v920 = vmul.f32 %v915, %v919
    %921 = vst.msk [vmem:[#allocation7 + $0x8] sm:$0xff] %vm144, %v920
    %922 = vrot.lane.b32.xlu0 %v138, 64
    %v923 = vpop.permute.xlu0 %922
    %v926 = vsel %vm144, %v920, 0
    %928 = vmatprep.subr.mxu0 0.0
    %929 = vmatpush1.msra.mxu0 %v923
    %930 = vmatprep.subr.mxu0 0.0
    %931 = vmatpush1.msra.mxu0 0.0
    %932 = vmatprep.subr.mxu0 0.0
    %933 = vmatpush1.msra.mxu0 0.0
    %934 = vmatprep.subr.mxu0 0.0
    %935 = vmatpush1.msra.mxu0 0.0
    %936 = vmatprep.subr.mxu0 0.0
    %937 = vmatpush1.msra.mxu0 0.0
    %938 = vmatprep.subr.mxu0 0.0
    %939 = vmatpush1.msra.mxu0 0.0
    %940 = vmatprep.subr.mxu0 0.0
    %941 = vmatpush1.msra.mxu0 0.0
    %942 = vmatprep.subr.mxu0 0.0
    %943 = vmatpush1.msra.mxu0 0.0
    %944 = vmatprep.subr.mxu0 0.0
    %945 = vmatpush1.msra.mxu0 0.0
    %946 = vmatprep.subr.mxu0 0.0
    %947 = vmatpush1.msra.mxu0 0.0
    %948 = vmatprep.subr.mxu0 0.0
    %949 = vmatpush1.msra.mxu0 0.0
    %950 = vmatprep.subr.mxu0 0.0
    %951 = vmatpush1.msra.mxu0 0.0
    %952 = vmatprep.subr.mxu0 0.0
    %953 = vmatpush1.msra.mxu0 0.0
    %954 = vmatprep.subr.mxu0 0.0
    %955 = vmatpush1.msra.mxu0 0.0
    %956 = vmatprep.subr.mxu0 0.0
    %957 = vmatpush1.msra.mxu0 0.0
    %958 = vmatprep.subr.mxu0 0.0
    %959 = vmatpush1.msra.mxu0 0.0
    %960 = vmatprep.subr.mxu0 0.0
    %961 = vmatpush1.msra.mxu0 0.0
    %962 = vmatprep.subr.mxu0 0.0
    %963 = vmatpush1.msra.mxu0 0.0
    %964 = vmatprep.subr.mxu0 0.0
    %965 = vmatpush1.msra.mxu0 0.0
    %966 = vmatprep.subr.mxu0 0.0
    %967 = vmatpush1.msra.mxu0 0.0
    %968 = vmatprep.subr.mxu0 0.0
    %969 = vmatpush1.msra.mxu0 0.0
    %970 = vmatprep.subr.mxu0 0.0
    %971 = vmatpush1.msra.mxu0 0.0
    %972 = vmatprep.subr.mxu0 0.0
    %973 = vmatpush1.msra.mxu0 0.0
    %974 = vmatprep.subr.mxu0 0.0
    %975 = vmatpush1.msra.mxu0 0.0
    %976 = vmatprep.subr.mxu0 0.0
    %977 = vmatpush1.msra.mxu0 0.0
    %978 = vmatprep.subr.mxu0 0.0
    %979 = vmatpush1.msra.mxu0 0.0
    %980 = vmatprep.subr.mxu0 0.0
    %981 = vmatpush1.msra.mxu0 0.0
    %982 = vmatprep.subr.mxu0 0.0
    %983 = vmatpush1.msra.mxu0 0.0
    %984 = vmatprep.subr.mxu0 0.0
    %985 = vmatpush1.msra.mxu0 0.0
    %986 = vmatprep.subr.mxu0 0.0
    %987 = vmatpush1.msra.mxu0 0.0
    %988 = vmatprep.subr.mxu0 0.0
    %989 = vmatpush1.msra.mxu0 0.0
    %990 = vmatprep.subr.mxu0 0.0
    %991 = vmatpush1.msra.mxu0 0.0
    %992 = vmatprep.mubr.f32.mxu0 0.0
    %993 = vmatmul.mubr.f32.gmra.mrb[0].mxu0 %v926
    %v994 = vpop.f32.mrb[0].mxu0
    %v995 = vadd.f32 0.0, %v994
    %v996 = vpop.f32.mrb[0].mxu0
    %997 = vdwg.mxu0
    %998 = vst.msk [vmem:[#allocation2 + $0x8] sm:$0xff] %vm144, %v995
    %999 = vrot.lane.b32.xlu0 %v138, 120
    %v1000 = vpop.permute.xlu0 %999
    %1001 = vrot.lane.b32.xlu0 %v138, 88
    %v1002 = vpop.permute.xlu0 %1001
    %v1003 = vsel %vm144, %v1000, 0
    %v1005 = vsel %vm144, %v1002, 0
    %1007 = vmatprep.subr.mxu0 0.0
    %1008 = vmatpush1.xpose.msra.mxu0 %v1005
    %1009 = vmatprep.subr.mxu0 0.0
    %1010 = vmatpush1.xpose.msra.mxu0 0.0
    %1011 = vmatprep.subr.mxu0 0.0
    %1012 = vmatpush1.xpose.msra.mxu0 0.0
    %1013 = vmatprep.subr.mxu0 0.0
    %1014 = vmatpush1.xpose.msra.mxu0 0.0
    %1015 = vmatprep.subr.mxu0 0.0
    %1016 = vmatpush1.xpose.msra.mxu0 0.0
    %1017 = vmatprep.subr.mxu0 0.0
    %1018 = vmatpush1.xpose.msra.mxu0 0.0
    %1019 = vmatprep.subr.mxu0 0.0
    %1020 = vmatpush1.xpose.msra.mxu0 0.0
    %1021 = vmatprep.subr.mxu0 0.0
    %1022 = vmatpush1.xpose.msra.mxu0 0.0
    %1023 = vmatprep.subr.mxu0 0.0
    %1024 = vmatpush1.xpose.msra.mxu0 0.0
    %1025 = vmatprep.subr.mxu0 0.0
    %1026 = vmatpush1.xpose.msra.mxu0 0.0
    %1027 = vmatprep.subr.mxu0 0.0
    %1028 = vmatpush1.xpose.msra.mxu0 0.0
    %1029 = vmatprep.subr.mxu0 0.0
    %1030 = vmatpush1.xpose.msra.mxu0 0.0
    %1031 = vmatprep.subr.mxu0 0.0
    %1032 = vmatpush1.xpose.msra.mxu0 0.0
    %1033 = vmatprep.subr.mxu0 0.0
    %1034 = vmatpush1.xpose.msra.mxu0 0.0
    %1035 = vmatprep.subr.mxu0 0.0
    %1036 = vmatpush1.xpose.msra.mxu0 0.0
    %1037 = vmatprep.subr.mxu0 0.0
    %1038 = vmatpush1.xpose.msra.mxu0 0.0
    %1039 = vmatprep.subr.mxu0 0.0
    %1040 = vmatpush1.xpose.msra.mxu0 0.0
    %1041 = vmatprep.subr.mxu0 0.0
    %1042 = vmatpush1.xpose.msra.mxu0 0.0
    %1043 = vmatprep.subr.mxu0 0.0
    %1044 = vmatpush1.xpose.msra.mxu0 0.0
    %1045 = vmatprep.subr.mxu0 0.0
    %1046 = vmatpush1.xpose.msra.mxu0 0.0
    %1047 = vmatprep.subr.mxu0 0.0
    %1048 = vmatpush1.xpose.msra.mxu0 0.0
    %1049 = vmatprep.subr.mxu0 0.0
    %1050 = vmatpush1.xpose.msra.mxu0 0.0
    %1051 = vmatprep.subr.mxu0 0.0
    %1052 = vmatpush1.xpose.msra.mxu0 0.0
    %1053 = vmatprep.subr.mxu0 0.0
    %1054 = vmatpush1.xpose.msra.mxu0 0.0
    %1055 = vmatprep.subr.mxu0 0.0
    %1056 = vmatpush1.xpose.msra.mxu0 0.0
    %1057 = vmatprep.subr.mxu0 0.0
    %1058 = vmatpush1.xpose.msra.mxu0 0.0
    %1059 = vmatprep.subr.mxu0 0.0
    %1060 = vmatpush1.xpose.msra.mxu0 0.0
    %1061 = vmatprep.subr.mxu0 0.0
    %1062 = vmatpush1.xpose.msra.mxu0 0.0
    %1063 = vmatprep.subr.mxu0 0.0
    %1064 = vmatpush1.xpose.msra.mxu0 0.0
    %1065 = vmatprep.subr.mxu0 0.0
    %1066 = vmatpush1.xpose.msra.mxu0 0.0
    %1067 = vmatprep.subr.mxu0 0.0
    %1068 = vmatpush1.xpose.msra.mxu0 0.0
    %1069 = vmatprep.subr.mxu0 0.0
    %1070 = vmatpush1.xpose.msra.mxu0 0.0
    %1071 = vmatprep.mubr.f32.mxu0 0.0
    %1072 = vmatmul.mubr.f32.gmra.mrb[0].mxu0 %v1003
    %v1073 = vpop.f32.mrb[0].mxu0
    %v1074 = vadd.f32 0.0, %v1073
    %v1075 = vpop.f32.mrb[0].mxu0
    %1076 = vdwg.mxu0
    %v1077 = vsel %vm144, %v1074, -inf
    %1078 = vmax.xlane.f32.xlu0 %v1077
    %v1079 = vpop.xlane.xlu0 %1078
    %v1080 = vsub.f32 %v1074, %v1079
    %v1081 = vmul.f32 %v1080, 1.442695
    %v1082 = vpow.pop %v1081
    %v1083 = vsel %vm144, %v1082, 0.0
    %1084 = vadd.xlane.f32.xlu0 %v1083
    %v1085 = vpop.xlane.xlu0 %1084
    %v1086 = vrcp.pop %v1085
    %v1087 = vmul.f32 %v1082, %v1086
    %1089 = vrot.lane.b32.xlu0 %v1087, 8
    %v1090 = vpop.permute.xlu0 %1089
    %1092 = vst.msk [vmem:[#allocation7 + $0x8] sm:$0xff] %vm401, %v1090
    %1093 = vrot.lane.b32.xlu0 %v138, 56
    %v1094 = vpop.permute.xlu0 %1093
    %v1096 = vsel %vm144, %v1087, 0
    %1098 = vmatprep.subr.mxu0 0.0
    %1099 = vmatpush1.msra.mxu0 %v1094
    %1100 = vmatprep.subr.mxu0 0.0
    %1101 = vmatpush1.msra.mxu0 0.0
    %1102 = vmatprep.subr.mxu0 0.0
    %1103 = vmatpush1.msra.mxu0 0.0
    %1104 = vmatprep.subr.mxu0 0.0
    %1105 = vmatpush1.msra.mxu0 0.0
    %1106 = vmatprep.subr.mxu0 0.0
    %1107 = vmatpush1.msra.mxu0 0.0
    %1108 = vmatprep.subr.mxu0 0.0
    %1109 = vmatpush1.msra.mxu0 0.0
    %1110 = vmatprep.subr.mxu0 0.0
    %1111 = vmatpush1.msra.mxu0 0.0
    %1112 = vmatprep.subr.mxu0 0.0
    %1113 = vmatpush1.msra.mxu0 0.0
    %1114 = vmatprep.subr.mxu0 0.0
    %1115 = vmatpush1.msra.mxu0 0.0
    %1116 = vmatprep.subr.mxu0 0.0
    %1117 = vmatpush1.msra.mxu0 0.0
    %1118 = vmatprep.subr.mxu0 0.0
    %1119 = vmatpush1.msra.mxu0 0.0
    %1120 = vmatprep.subr.mxu0 0.0
    %1121 = vmatpush1.msra.mxu0 0.0
    %1122 = vmatprep.subr.mxu0 0.0
    %1123 = vmatpush1.msra.mxu0 0.0
    %1124 = vmatprep.subr.mxu0 0.0
    %1125 = vmatpush1.msra.mxu0 0.0
    %1126 = vmatprep.subr.mxu0 0.0
    %1127 = vmatpush1.msra.mxu0 0.0
    %1128 = vmatprep.subr.mxu0 0.0
    %1129 = vmatpush1.msra.mxu0 0.0
    %1130 = vmatprep.subr.mxu0 0.0
    %1131 = vmatpush1.msra.mxu0 0.0
    %1132 = vmatprep.subr.mxu0 0.0
    %1133 = vmatpush1.msra.mxu0 0.0
    %1134 = vmatprep.subr.mxu0 0.0
    %1135 = vmatpush1.msra.mxu0 0.0
    %1136 = vmatprep.subr.mxu0 0.0
    %1137 = vmatpush1.msra.mxu0 0.0
    %1138 = vmatprep.subr.mxu0 0.0
    %1139 = vmatpush1.msra.mxu0 0.0
    %1140 = vmatprep.subr.mxu0 0.0
    %1141 = vmatpush1.msra.mxu0 0.0
    %1142 = vmatprep.subr.mxu0 0.0
    %1143 = vmatpush1.msra.mxu0 0.0
    %1144 = vmatprep.subr.mxu0 0.0
    %1145 = vmatpush1.msra.mxu0 0.0
    %1146 = vmatprep.subr.mxu0 0.0
    %1147 = vmatpush1.msra.mxu0 0.0
    %1148 = vmatprep.subr.mxu0 0.0
    %1149 = vmatpush1.msra.mxu0 0.0
    %1150 = vmatprep.subr.mxu0 0.0
    %1151 = vmatpush1.msra.mxu0 0.0
    %1152 = vmatprep.subr.mxu0 0.0
    %1153 = vmatpush1.msra.mxu0 0.0
    %1154 = vmatprep.subr.mxu0 0.0
    %1155 = vmatpush1.msra.mxu0 0.0
    %1156 = vmatprep.subr.mxu0 0.0
    %1157 = vmatpush1.msra.mxu0 0.0
    %1158 = vmatprep.subr.mxu0 0.0
    %1159 = vmatpush1.msra.mxu0 0.0
    %1160 = vmatprep.subr.mxu0 0.0
    %1161 = vmatpush1.msra.mxu0 0.0
    %1162 = vmatprep.mubr.f32.mxu0 0.0
    %1163 = vmatmul.mubr.f32.gmra.mrb[0].mxu0 %v1096
    %v1164 = vpop.f32.mrb[0].mxu0
    %v1165 = vadd.f32 0.0, %v1164
    %v1166 = vpop.f32.mrb[0].mxu0
    %1167 = vdwg.mxu0
    %1169 = vrot.lane.b32.xlu0 %v1165, 8
    %v1170 = vpop.permute.xlu0 %1169
    %1172 = vst.msk [vmem:[#allocation2 + $0x8] sm:$0xff] %vm401, %v1170
    %1173 = vrot.lane.b32.xlu0 %v138, 112
    %v1174 = vpop.permute.xlu0 %1173
    %1175 = vrot.lane.b32.xlu0 %v138, 80
    %v1176 = vpop.permute.xlu0 %1175
    %v1177 = vsel %vm144, %v1174, 0
    %v1179 = vsel %vm144, %v1176, 0
    %1181 = vmatprep.subr.mxu0 0.0
    %1182 = vmatpush1.xpose.msra.mxu0 %v1179
    %1183 = vmatprep.subr.mxu0 0.0
    %1184 = vmatpush1.xpose.msra.mxu0 0.0
    %1185 = vmatprep.subr.mxu0 0.0
    %1186 = vmatpush1.xpose.msra.mxu0 0.0
    %1187 = vmatprep.subr.mxu0 0.0
    %1188 = vmatpush1.xpose.msra.mxu0 0.0
    %1189 = vmatprep.subr.mxu0 0.0
    %1190 = vmatpush1.xpose.msra.mxu0 0.0
    %1191 = vmatprep.subr.mxu0 0.0
    %1192 = vmatpush1.xpose.msra.mxu0 0.0
    %1193 = vmatprep.subr.mxu0 0.0
    %1194 = vmatpush1.xpose.msra.mxu0 0.0
    %1195 = vmatprep.subr.mxu0 0.0
    %1196 = vmatpush1.xpose.msra.mxu0 0.0
    %1197 = vmatprep.subr.mxu0 0.0
    %1198 = vmatpush1.xpose.msra.mxu0 0.0
    %1199 = vmatprep.subr.mxu0 0.0
    %1200 = vmatpush1.xpose.msra.mxu0 0.0
    %1201 = vmatprep.subr.mxu0 0.0
    %1202 = vmatpush1.xpose.msra.mxu0 0.0
    %1203 = vmatprep.subr.mxu0 0.0
    %1204 = vmatpush1.xpose.msra.mxu0 0.0
    %1205 = vmatprep.subr.mxu0 0.0
    %1206 = vmatpush1.xpose.msra.mxu0 0.0
    %1207 = vmatprep.subr.mxu0 0.0
    %1208 = vmatpush1.xpose.msra.mxu0 0.0
    %1209 = vmatprep.subr.mxu0 0.0
    %1210 = vmatpush1.xpose.msra.mxu0 0.0
    %1211 = vmatprep.subr.mxu0 0.0
    %1212 = vmatpush1.xpose.msra.mxu0 0.0
    %1213 = vmatprep.subr.mxu0 0.0
    %1214 = vmatpush1.xpose.msra.mxu0 0.0
    %1215 = vmatprep.subr.mxu0 0.0
    %1216 = vmatpush1.xpose.msra.mxu0 0.0
    %1217 = vmatprep.subr.mxu0 0.0
    %1218 = vmatpush1.xpose.msra.mxu0 0.0
    %1219 = vmatprep.subr.mxu0 0.0
    %1220 = vmatpush1.xpose.msra.mxu0 0.0
    %1221 = vmatprep.subr.mxu0 0.0
    %1222 = vmatpush1.xpose.msra.mxu0 0.0
    %1223 = vmatprep.subr.mxu0 0.0
    %1224 = vmatpush1.xpose.msra.mxu0 0.0
    %1225 = vmatprep.subr.mxu0 0.0
    %1226 = vmatpush1.xpose.msra.mxu0 0.0
    %1227 = vmatprep.subr.mxu0 0.0
    %1228 = vmatpush1.xpose.msra.mxu0 0.0
    %1229 = vmatprep.subr.mxu0 0.0
    %1230 = vmatpush1.xpose.msra.mxu0 0.0
    %1231 = vmatprep.subr.mxu0 0.0
    %1232 = vmatpush1.xpose.msra.mxu0 0.0
    %1233 = vmatprep.subr.mxu0 0.0
    %1234 = vmatpush1.xpose.msra.mxu0 0.0
    %1235 = vmatprep.subr.mxu0 0.0
    %1236 = vmatpush1.xpose.msra.mxu0 0.0
    %1237 = vmatprep.subr.mxu0 0.0
    %1238 = vmatpush1.xpose.msra.mxu0 0.0
    %1239 = vmatprep.subr.mxu0 0.0
    %1240 = vmatpush1.xpose.msra.mxu0 0.0
    %1241 = vmatprep.subr.mxu0 0.0
    %1242 = vmatpush1.xpose.msra.mxu0 0.0
    %1243 = vmatprep.subr.mxu0 0.0
    %1244 = vmatpush1.xpose.msra.mxu0 0.0
    %1245 = vmatprep.mubr.f32.mxu0 0.0
    %1246 = vmatmul.mubr.f32.gmra.mrb[0].mxu0 %v1177
    %v1247 = vpop.f32.mrb[0].mxu0
    %v1248 = vadd.f32 0.0, %v1247
    %v1249 = vpop.f32.mrb[0].mxu0
    %1250 = vdwg.mxu0
    %v1251 = vsel %vm144, %v1248, -inf
    %1252 = vmax.xlane.f32.xlu0 %v1251
    %v1253 = vpop.xlane.xlu0 %1252
    %v1254 = vsub.f32 %v1248, %v1253
    %v1255 = vmul.f32 %v1254, 1.442695
    %v1256 = vpow.pop %v1255
    %v1257 = vsel %vm144, %v1256, 0.0
    %1258 = vadd.xlane.f32.xlu0 %v1257
    %v1259 = vpop.xlane.xlu0 %1258
    %v1260 = vrcp.pop %v1259
    %v1261 = vmul.f32 %v1256, %v1260
    %1263 = vrot.lane.b32.xlu0 %v1261, 16
    %v1264 = vpop.permute.xlu0 %1263
    %1266 = vst.msk [vmem:[#allocation7 + $0x8] sm:$0xff] %vm576, %v1264
    %1267 = vrot.lane.b32.xlu0 %v138, 48
    %v1268 = vpop.permute.xlu0 %1267
    %v1270 = vsel %vm144, %v1261, 0
    %1272 = vmatprep.subr.mxu0 0.0
    %1273 = vmatpush1.msra.mxu0 %v1268
    %1274 = vmatprep.subr.mxu0 0.0
    %1275 = vmatpush1.msra.mxu0 0.0
    %1276 = vmatprep.subr.mxu0 0.0
    %1277 = vmatpush1.msra.mxu0 0.0
    %1278 = vmatprep.subr.mxu0 0.0
    %1279 = vmatpush1.msra.mxu0 0.0
    %1280 = vmatprep.subr.mxu0 0.0
    %1281 = vmatpush1.msra.mxu0 0.0
    %1282 = vmatprep.subr.mxu0 0.0
    %1283 = vmatpush1.msra.mxu0 0.0
    %1284 = vmatprep.subr.mxu0 0.0
    %1285 = vmatpush1.msra.mxu0 0.0
    %1286 = vmatprep.subr.mxu0 0.0
    %1287 = vmatpush1.msra.mxu0 0.0
    %1288 = vmatprep.subr.mxu0 0.0
    %1289 = vmatpush1.msra.mxu0 0.0
    %1290 = vmatprep.subr.mxu0 0.0
    %1291 = vmatpush1.msra.mxu0 0.0
    %1292 = vmatprep.subr.mxu0 0.0
    %1293 = vmatpush1.msra.mxu0 0.0
    %1294 = vmatprep.subr.mxu0 0.0
    %1295 = vmatpush1.msra.mxu0 0.0
    %1296 = vmatprep.subr.mxu0 0.0
    %1297 = vmatpush1.msra.mxu0 0.0
    %1298 = vmatprep.subr.mxu0 0.0
    %1299 = vmatpush1.msra.mxu0 0.0
    %1300 = vmatprep.subr.mxu0 0.0
    %1301 = vmatpush1.msra.mxu0 0.0
    %1302 = vmatprep.subr.mxu0 0.0
    %1303 = vmatpush1.msra.mxu0 0.0
    %1304 = vmatprep.subr.mxu0 0.0
    %1305 = vmatpush1.msra.mxu0 0.0
    %1306 = vmatprep.subr.mxu0 0.0
    %1307 = vmatpush1.msra.mxu0 0.0
    %1308 = vmatprep.subr.mxu0 0.0
    %1309 = vmatpush1.msra.mxu0 0.0
    %1310 = vmatprep.subr.mxu0 0.0
    %1311 = vmatpush1.msra.mxu0 0.0
    %1312 = vmatprep.subr.mxu0 0.0
    %1313 = vmatpush1.msra.mxu0 0.0
    %1314 = vmatprep.subr.mxu0 0.0
    %1315 = vmatpush1.msra.mxu0 0.0
    %1316 = vmatprep.subr.mxu0 0.0
    %1317 = vmatpush1.msra.mxu0 0.0
    %1318 = vmatprep.subr.mxu0 0.0
    %1319 = vmatpush1.msra.mxu0 0.0
    %1320 = vmatprep.subr.mxu0 0.0
    %1321 = vmatpush1.msra.mxu0 0.0
    %1322 = vmatprep.subr.mxu0 0.0
    %1323 = vmatpush1.msra.mxu0 0.0
    %1324 = vmatprep.subr.mxu0 0.0
    %1325 = vmatpush1.msra.mxu0 0.0
    %1326 = vmatprep.subr.mxu0 0.0
    %1327 = vmatpush1.msra.mxu0 0.0
    %1328 = vmatprep.subr.mxu0 0.0
    %1329 = vmatpush1.msra.mxu0 0.0
    %1330 = vmatprep.subr.mxu0 0.0
    %1331 = vmatpush1.msra.mxu0 0.0
    %1332 = vmatprep.subr.mxu0 0.0
    %1333 = vmatpush1.msra.mxu0 0.0
    %1334 = vmatprep.subr.mxu0 0.0
    %1335 = vmatpush1.msra.mxu0 0.0
    %1336 = vmatprep.mubr.f32.mxu0 0.0
    %1337 = vmatmul.mubr.f32.gmra.mrb[0].mxu0 %v1270
    %v1338 = vpop.f32.mrb[0].mxu0
    %v1339 = vadd.f32 0.0, %v1338
    %v1340 = vpop.f32.mrb[0].mxu0
    %1341 = vdwg.mxu0
    %1343 = vrot.lane.b32.xlu0 %v1339, 16
    %v1344 = vpop.permute.xlu0 %1343
    %1346 = vst.msk [vmem:[#allocation2 + $0x8] sm:$0xff] %vm576, %v1344
    %1347 = vrot.lane.b32.xlu0 %v138, 104
    %v1348 = vpop.permute.xlu0 %1347
    %1349 = vrot.lane.b32.xlu0 %v138, 72
    %v1350 = vpop.permute.xlu0 %1349
    %v1351 = vsel %vm144, %v1348, 0
    %v1353 = vsel %vm144, %v1350, 0
    %1355 = vmatprep.subr.mxu0 0.0
    %1356 = vmatpush1.xpose.msra.mxu0 %v1353
    %1357 = vmatprep.subr.mxu0 0.0
    %1358 = vmatpush1.xpose.msra.mxu0 0.0
    %1359 = vmatprep.subr.mxu0 0.0
    %1360 = vmatpush1.xpose.msra.mxu0 0.0
    %1361 = vmatprep.subr.mxu0 0.0
    %1362 = vmatpush1.xpose.msra.mxu0 0.0
    %1363 = vmatprep.subr.mxu0 0.0
    %1364 = vmatpush1.xpose.msra.mxu0 0.0
    %1365 = vmatprep.subr.mxu0 0.0
    %1366 = vmatpush1.xpose.msra.mxu0 0.0
    %1367 = vmatprep.subr.mxu0 0.0
    %1368 = vmatpush1.xpose.msra.mxu0 0.0
    %1369 = vmatprep.subr.mxu0 0.0
    %1370 = vmatpush1.xpose.msra.mxu0 0.0
    %1371 = vmatprep.subr.mxu0 0.0
    %1372 = vmatpush1.xpose.msra.mxu0 0.0
    %1373 = vmatprep.subr.mxu0 0.0
    %1374 = vmatpush1.xpose.msra.mxu0 0.0
    %1375 = vmatprep.subr.mxu0 0.0
    %1376 = vmatpush1.xpose.msra.mxu0 0.0
    %1377 = vmatprep.subr.mxu0 0.0
    %1378 = vmatpush1.xpose.msra.mxu0 0.0
    %1379 = vmatprep.subr.mxu0 0.0
    %1380 = vmatpush1.xpose.msra.mxu0 0.0
    %1381 = vmatprep.subr.mxu0 0.0
    %1382 = vmatpush1.xpose.msra.mxu0 0.0
    %1383 = vmatprep.subr.mxu0 0.0
    %1384 = vmatpush1.xpose.msra.mxu0 0.0
    %1385 = vmatprep.subr.mxu0 0.0
    %1386 = vmatpush1.xpose.msra.mxu0 0.0
    %1387 = vmatprep.subr.mxu0 0.0
    %1388 = vmatpush1.xpose.msra.mxu0 0.0
    %1389 = vmatprep.subr.mxu0 0.0
    %1390 = vmatpush1.xpose.msra.mxu0 0.0
    %1391 = vmatprep.subr.mxu0 0.0
    %1392 = vmatpush1.xpose.msra.mxu0 0.0
    %1393 = vmatprep.subr.mxu0 0.0
    %1394 = vmatpush1.xpose.msra.mxu0 0.0
    %1395 = vmatprep.subr.mxu0 0.0
    %1396 = vmatpush1.xpose.msra.mxu0 0.0
    %1397 = vmatprep.subr.mxu0 0.0
    %1398 = vmatpush1.xpose.msra.mxu0 0.0
    %1399 = vmatprep.subr.mxu0 0.0
    %1400 = vmatpush1.xpose.msra.mxu0 0.0
    %1401 = vmatprep.subr.mxu0 0.0
    %1402 = vmatpush1.xpose.msra.mxu0 0.0
    %1403 = vmatprep.subr.mxu0 0.0
    %1404 = vmatpush1.xpose.msra.mxu0 0.0
    %1405 = vmatprep.subr.mxu0 0.0
    %1406 = vmatpush1.xpose.msra.mxu0 0.0
    %1407 = vmatprep.subr.mxu0 0.0
    %1408 = vmatpush1.xpose.msra.mxu0 0.0
    %1409 = vmatprep.subr.mxu0 0.0
    %1410 = vmatpush1.xpose.msra.mxu0 0.0
    %1411 = vmatprep.subr.mxu0 0.0
    %1412 = vmatpush1.xpose.msra.mxu0 0.0
    %1413 = vmatprep.subr.mxu0 0.0
    %1414 = vmatpush1.xpose.msra.mxu0 0.0
    %1415 = vmatprep.subr.mxu0 0.0
    %1416 = vmatpush1.xpose.msra.mxu0 0.0
    %1417 = vmatprep.subr.mxu0 0.0
    %1418 = vmatpush1.xpose.msra.mxu0 0.0
    %1419 = vmatprep.mubr.f32.mxu0 0.0
    %1420 = vmatmul.mubr.f32.gmra.mrb[0].mxu0 %v1351
    %v1421 = vpop.f32.mrb[0].mxu0
    %v1422 = vadd.f32 0.0, %v1421
    %v1423 = vpop.f32.mrb[0].mxu0
    %1424 = vdwg.mxu0
    %v1425 = vsel %vm144, %v1422, -inf
    %1426 = vmax.xlane.f32.xlu0 %v1425
    %v1427 = vpop.xlane.xlu0 %1426
    %v1428 = vsub.f32 %v1422, %v1427
    %v1429 = vmul.f32 %v1428, 1.442695
    %v1430 = vpow.pop %v1429
    %v1431 = vsel %vm144, %v1430, 0.0
    %1432 = vadd.xlane.f32.xlu0 %v1431
    %v1433 = vpop.xlane.xlu0 %1432
    %v1434 = vrcp.pop %v1433
    %v1435 = vmul.f32 %v1430, %v1434
    %1437 = vrot.lane.b32.xlu0 %v1435, 24
    %v1438 = vpop.permute.xlu0 %1437
    %1440 = vst.msk [vmem:[#allocation7 + $0x8] sm:$0xff] %vm751, %v1438
    %1441 = vrot.lane.b32.xlu0 %v138, 40
    %v1442 = vpop.permute.xlu0 %1441
    %v1444 = vsel %vm144, %v1435, 0
    %1446 = vmatprep.subr.mxu0 0.0
    %1447 = vmatpush1.msra.mxu0 %v1442
    %1448 = vmatprep.subr.mxu0 0.0
    %1449 = vmatpush1.msra.mxu0 0.0
    %1450 = vmatprep.subr.mxu0 0.0
    %1451 = vmatpush1.msra.mxu0 0.0
    %1452 = vmatprep.subr.mxu0 0.0
    %1453 = vmatpush1.msra.mxu0 0.0
    %1454 = vmatprep.subr.mxu0 0.0
    %1455 = vmatpush1.msra.mxu0 0.0
    %1456 = vmatprep.subr.mxu0 0.0
    %1457 = vmatpush1.msra.mxu0 0.0
    %1458 = vmatprep.subr.mxu0 0.0
    %1459 = vmatpush1.msra.mxu0 0.0
    %1460 = vmatprep.subr.mxu0 0.0
    %1461 = vmatpush1.msra.mxu0 0.0
    %1462 = vmatprep.subr.mxu0 0.0
    %1463 = vmatpush1.msra.mxu0 0.0
    %1464 = vmatprep.subr.mxu0 0.0
    %1465 = vmatpush1.msra.mxu0 0.0
    %1466 = vmatprep.subr.mxu0 0.0
    %1467 = vmatpush1.msra.mxu0 0.0
    %1468 = vmatprep.subr.mxu0 0.0
    %1469 = vmatpush1.msra.mxu0 0.0
    %1470 = vmatprep.subr.mxu0 0.0
    %1471 = vmatpush1.msra.mxu0 0.0
    %1472 = vmatprep.subr.mxu0 0.0
    %1473 = vmatpush1.msra.mxu0 0.0
    %1474 = vmatprep.subr.mxu0 0.0
    %1475 = vmatpush1.msra.mxu0 0.0
    %1476 = vmatprep.subr.mxu0 0.0
    %1477 = vmatpush1.msra.mxu0 0.0
    %1478 = vmatprep.subr.mxu0 0.0
    %1479 = vmatpush1.msra.mxu0 0.0
    %1480 = vmatprep.subr.mxu0 0.0
    %1481 = vmatpush1.msra.mxu0 0.0
    %1482 = vmatprep.subr.mxu0 0.0
    %1483 = vmatpush1.msra.mxu0 0.0
    %1484 = vmatprep.subr.mxu0 0.0
    %1485 = vmatpush1.msra.mxu0 0.0
    %1486 = vmatprep.subr.mxu0 0.0
    %1487 = vmatpush1.msra.mxu0 0.0
    %1488 = vmatprep.subr.mxu0 0.0
    %1489 = vmatpush1.msra.mxu0 0.0
    %1490 = vmatprep.subr.mxu0 0.0
    %1491 = vmatpush1.msra.mxu0 0.0
    %1492 = vmatprep.subr.mxu0 0.0
    %1493 = vmatpush1.msra.mxu0 0.0
    %1494 = vmatprep.subr.mxu0 0.0
    %1495 = vmatpush1.msra.mxu0 0.0
    %1496 = vmatprep.subr.mxu0 0.0
    %1497 = vmatpush1.msra.mxu0 0.0
    %1498 = vmatprep.subr.mxu0 0.0
    %1499 = vmatpush1.msra.mxu0 0.0
    %1500 = vmatprep.subr.mxu0 0.0
    %1501 = vmatpush1.msra.mxu0 0.0
    %1502 = vmatprep.subr.mxu0 0.0
    %1503 = vmatpush1.msra.mxu0 0.0
    %1504 = vmatprep.subr.mxu0 0.0
    %1505 = vmatpush1.msra.mxu0 0.0
    %1506 = vmatprep.subr.mxu0 0.0
    %1507 = vmatpush1.msra.mxu0 0.0
    %1508 = vmatprep.subr.mxu0 0.0
    %1509 = vmatpush1.msra.mxu0 0.0
    %1510 = vmatprep.mubr.f32.mxu0 0.0
    %1511 = vmatmul.mubr.f32.gmra.mrb[0].mxu0 %v1444
    %v1512 = vpop.f32.mrb[0].mxu0
    %v1513 = vadd.f32 0.0, %v1512
    %v1514 = vpop.f32.mrb[0].mxu0
    %1515 = vdwg.mxu0
    %1517 = vrot.lane.b32.xlu0 %v1513, 24
    %v1518 = vpop.permute.xlu0 %1517
    %1520 = vst.msk [vmem:[#allocation2 + $0x8] sm:$0xff] %vm751, %v1518
    %v1521 = vld [vmem:[#allocation2] sm:$0xff]
    %v1522 = vld [vmem:[#allocation2 + $0x8] sm:$0xff]
    %v1523 = vld [vmem:[%s2] sm:$0xff]
    %v1524 = vld [vmem:[%s2 + $0x8] sm:$0xff]
    %v1525 = vld [vmem:[%s2 + $0x10] sm:$0xff]
    %v1526 = vld [vmem:[%s2 + $0x18] sm:$0xff]
    %v1527 = vlaneseq
    %v1528 = vshrl.u32 %v1527, 7
    %v1529 = vsub.s32 0, %v1528
    %v1530 = vrot.slane %v42, %v1529
    %v1532 = vsel %vm59, %v1521, 0
    %v1535 = vsel %vm59, %v1522, 0
    %1537 = vmatprep.subr.mxu0 0.0
    %1538 = vmatpush1.msra.mxu0 %v1523
    %1539 = vmatprep.subr.mxu0 0.0
    %1540 = vmatpush1.msra.mxu0 %v1524
    %1541 = vmatprep.subr.mxu0 0.0
    %1542 = vmatpush1.msra.mxu0 %v1525
    %1543 = vmatprep.subr.mxu0 0.0
    %1544 = vmatpush1.msra.mxu0 %v1526
    %1545 = vmatprep.subr.mxu0 0.0
    %1546 = vmatpush1.msra.mxu0 0.0
    %1547 = vmatprep.subr.mxu0 0.0
    %1548 = vmatpush1.msra.mxu0 0.0
    %1549 = vmatprep.subr.mxu0 0.0
    %1550 = vmatpush1.msra.mxu0 0.0
    %1551 = vmatprep.subr.mxu0 0.0
    %1552 = vmatpush1.msra.mxu0 0.0
    %1553 = vmatprep.subr.mxu0 0.0
    %1554 = vmatpush1.msra.mxu0 0.0
    %1555 = vmatprep.subr.mxu0 0.0
    %1556 = vmatpush1.msra.mxu0 0.0
    %1557 = vmatprep.subr.mxu0 0.0
    %1558 = vmatpush1.msra.mxu0 0.0
    %1559 = vmatprep.subr.mxu0 0.0
    %1560 = vmatpush1.msra.mxu0 0.0
    %1561 = vmatprep.subr.mxu0 0.0
    %1562 = vmatpush1.msra.mxu0 0.0
    %1563 = vmatprep.subr.mxu0 0.0
    %1564 = vmatpush1.msra.mxu0 0.0
    %1565 = vmatprep.subr.mxu0 0.0
    %1566 = vmatpush1.msra.mxu0 0.0
    %1567 = vmatprep.subr.mxu0 0.0
    %1568 = vmatpush1.msra.mxu0 0.0
    %1569 = vmatprep.subr.mxu0 0.0
    %1570 = vmatpush1.msra.mxu0 0.0
    %1571 = vmatprep.subr.mxu0 0.0
    %1572 = vmatpush1.msra.mxu0 0.0
    %1573 = vmatprep.subr.mxu0 0.0
    %1574 = vmatpush1.msra.mxu0 0.0
    %1575 = vmatprep.subr.mxu0 0.0
    %1576 = vmatpush1.msra.mxu0 0.0
    %1577 = vmatprep.subr.mxu0 0.0
    %1578 = vmatpush1.msra.mxu0 0.0
    %1579 = vmatprep.subr.mxu0 0.0
    %1580 = vmatpush1.msra.mxu0 0.0
    %1581 = vmatprep.subr.mxu0 0.0
    %1582 = vmatpush1.msra.mxu0 0.0
    %1583 = vmatprep.subr.mxu0 0.0
    %1584 = vmatpush1.msra.mxu0 0.0
    %1585 = vmatprep.subr.mxu0 0.0
    %1586 = vmatpush1.msra.mxu0 0.0
    %1587 = vmatprep.subr.mxu0 0.0
    %1588 = vmatpush1.msra.mxu0 0.0
    %1589 = vmatprep.subr.mxu0 0.0
    %1590 = vmatpush1.msra.mxu0 0.0
    %1591 = vmatprep.subr.mxu0 0.0
    %1592 = vmatpush1.msra.mxu0 0.0
    %1593 = vmatprep.subr.mxu0 0.0
    %1594 = vmatpush1.msra.mxu0 0.0
    %1595 = vmatprep.subr.mxu0 0.0
    %1596 = vmatpush1.msra.mxu0 0.0
    %1597 = vmatprep.subr.mxu0 0.0
    %1598 = vmatpush1.msra.mxu0 0.0
    %1599 = vmatprep.subr.mxu0 0.0
    %1600 = vmatpush1.msra.mxu0 0.0
    %1601 = vmatprep.mubr.f32.mxu0 0.0
    %1602 = vmatmul.mubr.f32.gmra.mrb[0].mxu0 %v1532
    %v1603 = vpop.f32.mrb[0].mxu0
    %v1604 = vadd.f32 %v1530, %v1603
    %v1605 = vpop.f32.mrb[0].mxu0
    %1606 = vmatprep.mubr.f32.mxu0 0.0
    %1607 = vmatmul.mubr.f32.gmra.mrb[0].mxu0 %v1535
    %v1608 = vpop.f32.mrb[0].mxu0
    %v1609 = vadd.f32 %v1530, %v1608
    %v1610 = vpop.f32.mrb[0].mxu0
    %1611 = vdwg.mxu0
    %v1612 = vadd.f32 %v49, %v1604
    %v1613 = vadd.f32 %v50, %v1609
    %v1614 = vsel %vm59, %v1612, 0.0
    %1615 = vadd.xlane.f32.xlu0 %v1614
    %v1616 = vpop.xlane.xlu0 %1615
    %v1617 = vsel %vm59, %v1613, 0.0
    %1618 = vadd.xlane.f32.xlu0 %v1617
    %v1619 = vpop.xlane.xlu0 %1618
    %v1620 = vrcp.pop 32.0
    %v1621 = vmul.f32 %v1616, %v1620
    %v1622 = vmul.f32 %v1619, %v1620
    %v1623 = vsub.f32 %v1612, %v1621
    %v1624 = vsub.f32 %v1613, %v1622
    %v1625 = vmul.f32 %v1623, %v1623
    %v1626 = vmul.f32 %v1624, %v1624
    %v1627 = vsel %vm59, %v1625, 0.0
    %1628 = vadd.xlane.f32.xlu0 %v1627
    %v1629 = vpop.xlane.xlu0 %1628
    %v1630 = vsel %vm59, %v1626, 0.0
    %1631 = vadd.xlane.f32.xlu0 %v1630
    %v1632 = vpop.xlane.xlu0 %1631
    %v1633 = vmul.f32 %v1629, %v1620
    %v1634 = vmul.f32 %v1632, %v1620
    %v1635 = vadd.f32 %v1633, 1e-05
    %v1636 = vadd.f32 %v1634, 1e-05
    %v1637 = vrsqrt.pop %v1635
    %v1638 = vrsqrt.pop %v1636
    %v1639 = vmul.f32 %v1623, %v1637
    %v1640 = vmul.f32 %v1624, %v1638
    %v1641 = vlaneseq
    %v1642 = vshrl.u32 %v1641, 7
    %v1643 = vsub.s32 0, %v1642
    %v1644 = vrot.slane %v45, %v1643
    %v1645 = vmul.f32 %v1639, %v1644
    %v1646 = vmul.f32 %v1640, %v1644
    %v1647 = vlaneseq
    %v1648 = vshrl.u32 %v1647, 7
    %v1649 = vsub.s32 0, %v1648
    %v1650 = vrot.slane %v46, %v1649
    %v1651 = vadd.f32 %v1645, %v1650
    %v1652 = vadd.f32 %v1646, %v1650
    %v1653 = vld [vmem:[%s3] sm:$0xff]
    %v1654 = vld [vmem:[%s3 + $0x8] sm:$0xff]
    %v1655 = vld [vmem:[%s3 + $0x10] sm:$0xff]
    %v1656 = vld [vmem:[%s3 + $0x18] sm:$0xff]
    %v1657 = vlaneseq
    %v1658 = vshrl.u32 %v1657, 7
    %v1659 = vsub.s32 0, %v1658
    %v1660 = vrot.slane %v43, %v1659
    %v1662 = vsel %vm59, %v1651, 0
    %v1665 = vsel %vm59, %v1652, 0
    %1667 = vmatprep.subr.mxu0 0.0
    %1668 = vmatpush1.msra.mxu0 %v1653
    %1669 = vmatprep.subr.mxu0 0.0
    %1670 = vmatpush1.msra.mxu0 %v1654
    %1671 = vmatprep.subr.mxu0 0.0
    %1672 = vmatpush1.msra.mxu0 %v1655
    %1673 = vmatprep.subr.mxu0 0.0
    %1674 = vmatpush1.msra.mxu0 %v1656
    %1675 = vmatprep.subr.mxu0 0.0
    %1676 = vmatpush1.msra.mxu0 0.0
    %1677 = vmatprep.subr.mxu0 0.0
    %1678 = vmatpush1.msra.mxu0 0.0
    %1679 = vmatprep.subr.mxu0 0.0
    %1680 = vmatpush1.msra.mxu0 0.0
    %1681 = vmatprep.subr.mxu0 0.0
    %1682 = vmatpush1.msra.mxu0 0.0
    %1683 = vmatprep.subr.mxu0 0.0
    %1684 = vmatpush1.msra.mxu0 0.0
    %1685 = vmatprep.subr.mxu0 0.0
    %1686 = vmatpush1.msra.mxu0 0.0
    %1687 = vmatprep.subr.mxu0 0.0
    %1688 = vmatpush1.msra.mxu0 0.0
    %1689 = vmatprep.subr.mxu0 0.0
    %1690 = vmatpush1.msra.mxu0 0.0
    %1691 = vmatprep.subr.mxu0 0.0
    %1692 = vmatpush1.msra.mxu0 0.0
    %1693 = vmatprep.subr.mxu0 0.0
    %1694 = vmatpush1.msra.mxu0 0.0
    %1695 = vmatprep.subr.mxu0 0.0
    %1696 = vmatpush1.msra.mxu0 0.0
    %1697 = vmatprep.subr.mxu0 0.0
    %1698 = vmatpush1.msra.mxu0 0.0
    %1699 = vmatprep.subr.mxu0 0.0
    %1700 = vmatpush1.msra.mxu0 0.0
    %1701 = vmatprep.subr.mxu0 0.0
    %1702 = vmatpush1.msra.mxu0 0.0
    %1703 = vmatprep.subr.mxu0 0.0
    %1704 = vmatpush1.msra.mxu0 0.0
    %1705 = vmatprep.subr.mxu0 0.0
    %1706 = vmatpush1.msra.mxu0 0.0
    %1707 = vmatprep.subr.mxu0 0.0
    %1708 = vmatpush1.msra.mxu0 0.0
    %1709 = vmatprep.subr.mxu0 0.0
    %1710 = vmatpush1.msra.mxu0 0.0
    %1711 = vmatprep.subr.mxu0 0.0
    %1712 = vmatpush1.msra.mxu0 0.0
    %1713 = vmatprep.subr.mxu0 0.0
    %1714 = vmatpush1.msra.mxu0 0.0
    %1715 = vmatprep.subr.mxu0 0.0
    %1716 = vmatpush1.msra.mxu0 0.0
    %1717 = vmatprep.subr.mxu0 0.0
    %1718 = vmatpush1.msra.mxu0 0.0
    %1719 = vmatprep.subr.mxu0 0.0
    %1720 = vmatpush1.msra.mxu0 0.0
    %1721 = vmatprep.subr.mxu0 0.0
    %1722 = vmatpush1.msra.mxu0 0.0
    %1723 = vmatprep.subr.mxu0 0.0
    %1724 = vmatpush1.msra.mxu0 0.0
    %1725 = vmatprep.subr.mxu0 0.0
    %1726 = vmatpush1.msra.mxu0 0.0
    %1727 = vmatprep.subr.mxu0 0.0
    %1728 = vmatpush1.msra.mxu0 0.0
    %1729 = vmatprep.subr.mxu0 0.0
    %1730 = vmatpush1.msra.mxu0 0.0
    %1731 = vmatprep.mubr.f32.mxu0 0.0
    %1732 = vmatmul.mubr.f32.gmra.mrb[0].mxu0 %v1662
    %v1733 = vpop.f32.mrb[0].mxu0
    %v1734 = vadd.f32 %v1660, %v1733
    %v1735 = vpop.f32.mrb[0].mxu0
    %1736 = vmatprep.mubr.f32.mxu0 0.0
    %1737 = vmatmul.mubr.f32.gmra.mrb[0].mxu0 %v1665
    %v1738 = vpop.f32.mrb[0].mxu0
    %v1739 = vadd.f32 %v1660, %v1738
    %v1740 = vpop.f32.mrb[0].mxu0
    %1741 = vdwg.mxu0
    %v1742 = vmax.f32 %v1734, 0.0
    %v1743 = vmax.f32 %v1739, 0.0
    %v1744 = vld [vmem:[%s4] sm:$0xff]
    %v1745 = vld [vmem:[%s4 + $0x8] sm:$0xff]
    %v1746 = vld [vmem:[%s4 + $0x10] sm:$0xff]
    %v1747 = vld [vmem:[%s4 + $0x18] sm:$0xff]
    %v1748 = vld [vmem:[%s4 + $0x20] sm:$0xff]
    %v1749 = vld [vmem:[%s4 + $0x28] sm:$0xff]
    %v1750 = vld [vmem:[%s4 + $0x30] sm:$0xff]
    %v1751 = vld [vmem:[%s4 + $0x38] sm:$0xff]
    %v1752 = vlaneseq
    %v1753 = vshrl.u32 %v1752, 7
    %v1754 = vsub.s32 0, %v1753
    %v1755 = vrot.slane %v44, %v1754
    %vm1756 = vcmask 523264
    %v1758 = vsel %vm1756, %v1742, 0
    %v1761 = vsel %vm1756, %v1743, 0
    %1763 = vmatprep.subr.mxu0 0.0
    %1764 = vmatpush1.msra.mxu0 %v1744
    %1765 = vmatprep.subr.mxu0 0.0
    %1766 = vmatpush1.msra.mxu0 %v1745
    %1767 = vmatprep.subr.mxu0 0.0
    %1768 = vmatpush1.msra.mxu0 %v1746
    %1769 = vmatprep.subr.mxu0 0.0
    %1770 = vmatpush1.msra.mxu0 %v1747
    %1771 = vmatprep.subr.mxu0 0.0
    %1772 = vmatpush1.msra.mxu0 %v1748
    %1773 = vmatprep.subr.mxu0 0.0
    %1774 = vmatpush1.msra.mxu0 %v1749
    %1775 = vmatprep.subr.mxu0 0.0
    %1776 = vmatpush1.msra.mxu0 %v1750
    %1777 = vmatprep.subr.mxu0 0.0
    %1778 = vmatpush1.msra.mxu0 %v1751
    %1779 = vmatprep.subr.mxu0 0.0
    %1780 = vmatpush1.msra.mxu0 0.0
    %1781 = vmatprep.subr.mxu0 0.0
    %1782 = vmatpush1.msra.mxu0 0.0
    %1783 = vmatprep.subr.mxu0 0.0
    %1784 = vmatpush1.msra.mxu0 0.0
    %1785 = vmatprep.subr.mxu0 0.0
    %1786 = vmatpush1.msra.mxu0 0.0
    %1787 = vmatprep.subr.mxu0 0.0
    %1788 = vmatpush1.msra.mxu0 0.0
    %1789 = vmatprep.subr.mxu0 0.0
    %1790 = vmatpush1.msra.mxu0 0.0
    %1791 = vmatprep.subr.mxu0 0.0
    %1792 = vmatpush1.msra.mxu0 0.0
    %1793 = vmatprep.subr.mxu0 0.0
    %1794 = vmatpush1.msra.mxu0 0.0
    %1795 = vmatprep.subr.mxu0 0.0
    %1796 = vmatpush1.msra.mxu0 0.0
    %1797 = vmatprep.subr.mxu0 0.0
    %1798 = vmatpush1.msra.mxu0 0.0
    %1799 = vmatprep.subr.mxu0 0.0
    %1800 = vmatpush1.msra.mxu0 0.0
    %1801 = vmatprep.subr.mxu0 0.0
    %1802 = vmatpush1.msra.mxu0 0.0
    %1803 = vmatprep.subr.mxu0 0.0
    %1804 = vmatpush1.msra.mxu0 0.0
    %1805 = vmatprep.subr.mxu0 0.0
    %1806 = vmatpush1.msra.mxu0 0.0
    %1807 = vmatprep.subr.mxu0 0.0
    %1808 = vmatpush1.msra.mxu0 0.0
    %1809 = vmatprep.subr.mxu0 0.0
    %1810 = vmatpush1.msra.mxu0 0.0
    %1811 = vmatprep.subr.mxu0 0.0
    %1812 = vmatpush1.msra.mxu0 0.0
    %1813 = vmatprep.subr.mxu0 0.0
    %1814 = vmatpush1.msra.mxu0 0.0
    %1815 = vmatprep.subr.mxu0 0.0
    %1816 = vmatpush1.msra.mxu0 0.0
    %1817 = vmatprep.subr.mxu0 0.0
    %1818 = vmatpush1.msra.mxu0 0.0
    %1819 = vmatprep.subr.mxu0 0.0
    %1820 = vmatpush1.msra.mxu0 0.0
    %1821 = vmatprep.subr.mxu0 0.0
    %1822 = vmatpush1.msra.mxu0 0.0
    %1823 = vmatprep.subr.mxu0 0.0
    %1824 = vmatpush1.msra.mxu0 0.0
    %1825 = vmatprep.subr.mxu0 0.0
    %1826 = vmatpush1.msra.mxu0 0.0
    %1827 = vmatprep.mubr.f32.mxu0 0.0
    %1828 = vmatmul.mubr.f32.gmra.mrb[0].mxu0 %v1758
    %v1829 = vpop.f32.mrb[0].mxu0
    %v1830 = vadd.f32 %v1755, %v1829
    %v1831 = vpop.f32.mrb[0].mxu0
    %1832 = vmatprep.mubr.f32.mxu0 0.0
    %1833 = vmatmul.mubr.f32.gmra.mrb[0].mxu0 %v1761
    %v1834 = vpop.f32.mrb[0].mxu0
    %v1835 = vadd.f32 %v1755, %v1834
    %v1836 = vpop.f32.mrb[0].mxu0
    %1837 = vdwg.mxu0
    %v1838 = vadd.f32 %v1651, %v1830
    %v1839 = vadd.f32 %v1652, %v1835
    %v1840 = vsel %vm59, %v1838, 0.0
    %1841 = vadd.xlane.f32.xlu0 %v1840
    %v1842 = vpop.xlane.xlu0 %1841
    %v1843 = vsel %vm59, %v1839, 0.0
    %1844 = vadd.xlane.f32.xlu0 %v1843
    %v1845 = vpop.xlane.xlu0 %1844
    %v1846 = vmul.f32 %v1842, %v1620
    %v1847 = vmul.f32 %v1845, %v1620
    %v1848 = vsub.f32 %v1838, %v1846
    %v1849 = vsub.f32 %v1839, %v1847
    %v1850 = vmul.f32 %v1848, %v1848
    %v1851 = vmul.f32 %v1849, %v1849
    %v1852 = vsel %vm59, %v1850, 0.0
    %1853 = vadd.xlane.f32.xlu0 %v1852
    %v1854 = vpop.xlane.xlu0 %1853
    %v1855 = vsel %vm59, %v1851, 0.0
    %1856 = vadd.xlane.f32.xlu0 %v1855
    %v1857 = vpop.xlane.xlu0 %1856
    %v1858 = vmul.f32 %v1854, %v1620
    %v1859 = vmul.f32 %v1857, %v1620
    %v1860 = vadd.f32 %v1858, 1e-05
    %v1861 = vadd.f32 %v1859, 1e-05
    %v1862 = vrsqrt.pop %v1860
    %v1863 = vrsqrt.pop %v1861
    %v1864 = vmul.f32 %v1848, %v1862
    %v1865 = vmul.f32 %v1849, %v1863
    %v1866 = vlaneseq
    %v1867 = vshrl.u32 %v1866, 7
    %v1868 = vsub.s32 0, %v1867
    %v1869 = vrot.slane %v47, %v1868
    %v1870 = vmul.f32 %v1864, %v1869
    %v1871 = vmul.f32 %v1865, %v1869
    %v1872 = vlaneseq
    %v1873 = vshrl.u32 %v1872, 7
    %v1874 = vsub.s32 0, %v1873
    %v1875 = vrot.slane %v48, %v1874
    %v1876 = vadd.f32 %v1870, %v1875
    %v1877 = vadd.f32 %v1871, %v1875
    %1878 = vst.msk [vmem:[#allocation6] sm:$0xff] %vm59, %v1876
    %1879 = vst.msk [vmem:[#allocation6 + $0x8] sm:$0xff] %vm59, %v1877
    // Predicated region
    $region30: #{tpu_custom_call.1} parent=1 // pred_check
      _
    $region31: #{tpu_custom_call.1} parent=1 // pred_check_branch
      %1881 = sbr.rel (0) target = $region33
    $region32: #{tpu_custom_call.1} parent=1 // pred_region
      %s1883 = ssub.s32 256, 256
      %1884 = vsyncadd [#allocation5], %s1883
      %s1885 = sshll.u32 [#allocation6], 4
      %s1886 = int_to_ptr.vmem [resolvable:$true] %s1885
      %1891 = dma.vmem_to_hbm [thread:$0]  %s1886, 256, %s6, [#allocation5], 128, 128, 8
    $region33: #{tpu_custom_call.1} parent=1 // pred_fallthru
      _
    // Predicated region
    $region34: #{tpu_custom_call.1} parent=1 // pred_check
      _
    $region35: #{tpu_custom_call.1} parent=1 // pred_check_branch
      %1893 = sbr.rel (0) target = $region37
    $region36: #{tpu_custom_call.1} parent=1 // pred_region
      %s1895 = ssub.s32 256, 256
      %1896 = vsyncadd [#allocation8], %s1895
      %s1897 = sshll.u32 [#allocation7], 4
      %s1898 = int_to_ptr.vmem [resolvable:$true] %s1897
      %1903 = dma.vmem_to_hbm [thread:$0]  %s1898, 256, %s7, [#allocation8], 128, 128, 8
    $region37: #{tpu_custom_call.1} parent=1 // pred_fallthru
      _
    // Predicated region
    $region38: #{tpu_custom_call.1} parent=1 // pred_check
      _
    $region39: #{tpu_custom_call.1} parent=1 // pred_check_branch
      %1905 = sbr.rel (0) target = $region41
    $region40: #{tpu_custom_call.1} parent=1 // pred_region
      %1906 = dma.done [#allocation5], 256
    $region41: #{tpu_custom_call.1} parent=1 // pred_fallthru
      _
    // Predicated region
    $region42: #{tpu_custom_call.1} parent=1 // pred_check
      _
    $region43: #{tpu_custom_call.1} parent=1 // pred_check_branch
      %1908 = sbr.rel (0) target = $region45
    $region44: #{tpu_custom_call.1} parent=1 // pred_region
      %1909 = dma.done [#allocation8], 256
    $region45: #{tpu_custom_call.1} parent=1 // pred_fallthru
      _
    %1910 = vsyncpa [#allocation4], 1
    %1911 = vsyncpa [#allocation5], 1
    %1912 = vsyncpa [#allocation8], 1

</llo_original>
